<compile_context>
chip_gen: v6e
topology: v6e:2x2x1
jax: 0.10.0
libtpu: 0.0.40
codegen_flags: <defaults>
</compile_context>

<pallas_src>
import numpy as np
import jax
import jax.numpy as jnp
from jax.experimental import pallas as pl
from jax.experimental.pallas import tpu as pltpu


# ----------------------------------------------------------------------------
# Host-side bilinear interpolation matrices (torch F.interpolate, bilinear,
# align_corners=False), one axis at a time.
# ----------------------------------------------------------------------------
def _bilinear_resize_matrix_np(out_size, in_size):
    o = np.arange(out_size, dtype=np.float64)
    src = (o + 0.5) * (in_size / out_size) - 0.5
    src = np.maximum(src, 0.0)
    lo = np.minimum(np.floor(src).astype(np.int64), in_size - 1)
    hi = np.minimum(lo + 1, in_size - 1)
    lam = src - lo
    R = np.zeros((out_size, in_size), dtype=np.float32)
    rows = np.arange(out_size)
    R[rows, lo] += (1.0 - lam).astype(np.float32)
    R[rows, hi] += lam.astype(np.float32)
    return R


def _bilinear_resize_matrix(out_size, in_size):
    return jnp.asarray(_bilinear_resize_matrix_np(out_size, in_size))


# ----------------------------------------------------------------------------
# Fused kernel factory: gaussian weight maps + per-scale resize + aggregation.
# ----------------------------------------------------------------------------
def _make_fused_kernel(iso_c, inv_v, n_maps, H, W, n_w, with_mask, scale_dims):
    n_iso = len(iso_c)
    n_scales = len(scale_dims)
    n_in = 2 + 3 * n_scales

    def kernel(*refs):
        dmap_ref, mask_ref = refs[0], refs[1]
        out_refs = refs[n_in:n_in + n_scales]
        wmap_ref = refs[n_in + n_scales]            # (n_w*H, W) VMEM scratch

        # ---- stage 1: gaussian isoline maps (+ raw mask planes), VMEM only ----
        if n_maps == 1:                             # hoist shared planes
            d0 = dmap_ref[0, 0]
            m0 = mask_ref[0, 0]
        for i in range(n_iso):
            if n_maps == 1:
                d, m = d0, m0
            else:                                   # torch broadcast: N == I (or 1)
                n_idx = i if n_maps == n_iso else 0
                d = dmap_ref[0, n_idx]
                m = mask_ref[0, n_idx]
            diff = iso_c[i] - d
            wmap_ref[i * H:(i + 1) * H, :] = m * jnp.exp(-(diff * diff) * inv_v[i])
        if with_mask:
            for n in range(n_maps):
                r0 = (n_iso + n) * H
                wmap_ref[r0:r0 + H, :] = mask_ref[0, n]

        # ---- stage 2: per-scale bilinear resize (matmuls) + aggregation -------
        for s in range(n_scales):
            C, Hs, Ws = scale_dims[s]
            actp_ref = refs[2 + 3 * s]              # (1, Hs*Ws, C) channels-last
            ry_ref = refs[3 + 3 * s]                # (Hs, H)
            rxt_ref = refs[4 + 3 * s]               # (W, Ws)
            colr_ref = refs[n_in + n_scales + 1 + 2 * s]    # (n_w*H, Ws)
            wflat_ref = refs[n_in + n_scales + 2 + 2 * s]   # (n_w, Hs*Ws)

            # column resize of ALL weight maps in one MXU dot: (n_w*H, W)@(W, Ws)
            colr_ref[...] = jnp.dot(wmap_ref[...], rxt_ref[...],
                                    preferred_element_type=jnp.float32)

            # row resize per weight map (n_w is small); lane-flatten the small
            # (Hs, Ws) result into one (Hs*Ws,) row of the scratch so the
            # aggregation becomes a single big dot.
            for i in range(n_w):
                rr = jnp.dot(ry_ref[...], colr_ref[i * H:(i + 1) * H, :],
                             preferred_element_type=jnp.float32)     # (Hs, Ws)
                for r in range(Hs):
                    wflat_ref[i:i + 1, r * Ws:(r + 1) * Ws] = rr[r:r + 1, :]

            # aggregation: one MXU dot over the whole flattened spatial extent.
            wflat = wflat_ref[...]                                    # (n_w, Hs*Ws)
            num = jnp.dot(wflat, actp_ref[0],
                          preferred_element_type=jnp.float32)         # (n_w, C)
            den = jnp.sum(wflat, axis=1, keepdims=True)               # (n_w, 1)
            out_refs[s][0] = num / den            # single lane-dense (n_w, C) store

    return kernel


# ----------------------------------------------------------------------------
# Module equivalent
# ----------------------------------------------------------------------------
class DistanceMapToIsolineFeatures:
    def __init__(self, isolines, halfway_value=0.5):
        iso = np.asarray(isolines, dtype=np.float64).reshape(-1)
        mat = (iso[:, None] - iso[None, :]) ** 2          # cdist(...)**2
        mat = np.where(mat == 0.0, np.inf, mat)
        variances = -np.min(mat, axis=0) / (8.0 * np.log(halfway_value))
        self.isolines = jnp.asarray(iso, dtype=jnp.float32)
        self.vars = jnp.asarray(variances, dtype=jnp.float32)
        # concrete scalars baked into the kernel (module-construction constants)
        self._iso_c = [float(np.float32(v)) for v in iso]
        self._inv_v = [float(1.0 / np.float32(v)) for v in variances]
        self._cache = {}

    # Build (and cache) the pallas_call for a given static configuration.
    def _build(self, key):
        if key in self._cache:
            return self._cache[key]
        B, N, H, W, with_mask, scale_dims = key
        n_iso = len(self._iso_c)
        n_w = n_iso + (N if with_mask else 0)

        in_specs = [
            pl.BlockSpec((1, N, H, W), lambda b: (b, 0, 0, 0)),
            pl.BlockSpec((1, N, H, W), lambda b: (b, 0, 0, 0)),
        ]
        out_shapes, out_specs = [], []
        scratch = [pltpu.VMEM((n_w * H, W), jnp.float32)]
        for (C, Hs, Ws) in scale_dims:
            K = Hs * Ws
            in_specs.extend([
                pl.BlockSpec((1, K, C), lambda b: (b, 0, 0)),   # activations
                pl.BlockSpec((Hs, H), lambda b: (0, 0)),        # Ry
                pl.BlockSpec((W, Ws), lambda b: (0, 0)),        # Rx^T
            ])
            out_shapes.append(jax.ShapeDtypeStruct((B, n_w, C), jnp.float32))
            out_specs.append(pl.BlockSpec((1, n_w, C), lambda b: (b, 0, 0)))
            scratch.append(pltpu.VMEM((n_w * H, Ws), jnp.float32))
            scratch.append(pltpu.VMEM((n_w, K), jnp.float32))

        kernel = _make_fused_kernel(self._iso_c, self._inv_v, N, H, W, n_w,
                                    with_mask, scale_dims)

        # explicit VMEM limit: >= 32 MiB (v5e scoped default is only 16 MiB),
        # capped below v7x's 64 MiB physical VMEM.
        est = 2 * 2 * (N * H * W * 4) + n_w * H * W * 4
        for (C, Hs, Ws) in scale_dims:
            est += 2 * (Hs * Ws * C * 4) + (Hs * H + W * Ws) * 4
            est += 2 * (n_w * C * 4) + n_w * H * Ws * 4 + n_w * Hs * Ws * 4
        vmem_limit = int(min(64 * 1024 * 1024, max(32 * 1024 * 1024, 2 * est)))

        call = pl.pallas_call(
            kernel,
            out_shape=tuple(out_shapes),
            grid=(B,),
            in_specs=in_specs,
            out_specs=tuple(out_specs),
            scratch_shapes=scratch,
            compiler_params=pltpu.CompilerParams(
                dimension_semantics=("parallel",),
                vmem_limit_bytes=vmem_limit,
            ),
        )
        self._cache[key] = call
        return call

    def __call__(self, activations, distance_map, mask, compute_features_mask=False):
        if isinstance(activations, dict):
            acts = [activations[i] for i in range(len(activations))]
        else:
            acts = list(activations)
        acts = [a.astype(jnp.float32) for a in acts]
        dmap = distance_map.astype(jnp.float32)
        msk = mask.astype(jnp.float32)
        B, N, H, W = dmap.shape
        n_iso = len(self._iso_c)
        with_mask = bool(compute_features_mask)
        scale_dims = tuple((int(a.shape[1]), int(a.shape[2]), int(a.shape[3]))
                           for a in acts)

        call = self._build((B, N, H, W, with_mask, scale_dims))

        args = [dmap, msk]
        for a, (C, Hs, Ws) in zip(acts, scale_dims):
            # channels-last + flattened spatial (host-side, cheap): the in-kernel
            # aggregation is then a plain (n_w, Hs*Ws) @ (Hs*Ws, C) dot.
            actp = jnp.transpose(a, (0, 2, 3, 1)).reshape(B, Hs * Ws, C)
            ry = _bilinear_resize_matrix(Hs, H)                               # (Hs, H)
            rxt = jnp.asarray(np.ascontiguousarray(
                _bilinear_resize_matrix_np(Ws, W).T))                         # (W, Ws)
            args.extend([actp, ry, rxt])

        outs = call(*args)
        features_isolines = [o[:, :n_iso, :] for o in outs]
        features_mask = [o[:, n_iso:, :] for o in outs] if with_mask else []
        return features_isolines, features_mask


# ----------------------------------------------------------------------------
# Pure-JAX reference (numerical sanity check)
# ----------------------------------------------------------------------------
def _reference_forward(mod, activations, distance_map, mask, compute_features_mask):
    hp = jax.lax.Precision.HIGHEST
    if isinstance(activations, dict):
        acts = [activations[i] for i in range(len(activations))]
    else:
        acts = list(activations)
    iso = mod.isolines[None, :, None, None]
    var = mod.vars[None, :, None, None]
    iso_maps = mask * jnp.exp(-(iso - distance_map) ** 2 / var)
    B, N, H, W = distance_map.shape
    feats, fmask = [], []
    for act in acts:
        act = act.astype(jnp.float32)
        Hs, Ws = act.shape[-2], act.shape[-1]
        ry = _bilinear_resize_matrix(Hs, H)
        rx = _bilinear_resize_matrix(Ws, W)
        iso_s = jnp.einsum('sh,bihw,tw->bist', ry, iso_maps, rx, precision=hp)
        num = jnp.einsum('bist,bcst->bic', iso_s, act, precision=hp)
        den = iso_s.sum(axis=(-2, -1))
        feats.append(num / den[..., None])
        if compute_features_mask:
            m_s = jnp.einsum('sh,bnhw,tw->bnst', ry, mask, rx, precision=hp)
            nm = jnp.einsum('bnst,bcst->bnc', m_s, act, precision=hp)
            dm = m_s.sum(axis=(-2, -1))
            fmask.append(nm / dm[..., None])
    return feats, fmask


if __name__ == "__main__":
    key = jax.random.PRNGKey(0)
    k1, k2, k3, k4 = jax.random.split(key, 4)

    B, H, W = 2, 16, 16
    isolines = jnp.array([0.0, 0.5, 1.0], dtype=jnp.float32)
    mod = DistanceMapToIsolineFeatures(isolines, halfway_value=0.5)

    distance_map = jax.random.uniform(k1, (B, 1, H, W), dtype=jnp.float32)
    mask = (jax.random.uniform(k2, (B, 1, H, W)) > 0.3).astype(jnp.float32)
    activations = {
        0: jax.random.normal(k3, (B, 4, 8, 8), dtype=jnp.float32),
        1: jax.random.normal(k4, (B, 8, 4, 4), dtype=jnp.float32),
    }

    feats_iso, feats_mask = mod(activations, distance_map, mask,
                                compute_features_mask=True)
    jax.block_until_ready(feats_iso)
    jax.block_until_ready(feats_mask)

    # sanity check against a pure-JAX reference (kernel matmuls use the MXU at
    # default precision, hence the slightly relaxed tolerance)
    ref_iso, ref_mask = _reference_forward(mod, activations, distance_map, mask, True)
    for a, b in zip(feats_iso, ref_iso):
        np.testing.assert_allclose(np.asarray(a), np.asarray(b), rtol=5e-3, atol=5e-3)
    for a, b in zip(feats_mask, ref_mask):
        np.testing.assert_allclose(np.asarray(a), np.asarray(b), rtol=5e-3, atol=5e-3)

    print("KERNEL_OK")
</pallas_src>

<mosaic_0001>
module attributes {stable_mosaic.version = 11 : i64} {
  func.func @kernel(%arg0: i32, %arg1: memref<1x1x16x16xf32, #tpu.memory_space<vmem>>, %arg2: memref<1x1x16x16xf32, #tpu.memory_space<vmem>>, %arg3: memref<1x64x4xf32, #tpu.memory_space<vmem>>, %arg4: memref<8x16xf32, #tpu.memory_space<vmem>>, %arg5: memref<16x8xf32, #tpu.memory_space<vmem>>, %arg6: memref<1x16x8xf32, #tpu.memory_space<vmem>>, %arg7: memref<4x16xf32, #tpu.memory_space<vmem>>, %arg8: memref<16x4xf32, #tpu.memory_space<vmem>>, %arg9: memref<1x4x4xf32, #tpu.memory_space<vmem>>, %arg10: memref<1x4x8xf32, #tpu.memory_space<vmem>>, %arg11: memref<64x16xf32, #tpu.memory_space<vmem>>, %arg12: memref<64x8xf32, #tpu.memory_space<vmem>>, %arg13: memref<4x64xf32, #tpu.memory_space<vmem>>, %arg14: memref<64x4xf32, #tpu.memory_space<vmem>>, %arg15: memref<4x16xf32, #tpu.memory_space<vmem>>) attributes {dimension_semantics = [#tpu.dimension_semantics<parallel>], iteration_bounds = array<i64: 2>, scalar_prefetch = 0 : i64, scratch_operands = 5 : i64, tpu.core_type = #tpu.core_type<tc>, window_params = [{transform_indices = @transform_0, window_bounds = array<i64: 1, 1, 16, 16>}, {transform_indices = @transform_1, window_bounds = array<i64: 1, 1, 16, 16>}, {transform_indices = @transform_2, window_bounds = array<i64: 1, 64, 4>}, {pipeline_mode = #tpu.pipeline_mode<synchronous>, transform_indices = @transform_3, window_bounds = array<i64: 8, 16>}, {pipeline_mode = #tpu.pipeline_mode<synchronous>, transform_indices = @transform_4, window_bounds = array<i64: 16, 8>}, {transform_indices = @transform_5, window_bounds = array<i64: 1, 16, 8>}, {pipeline_mode = #tpu.pipeline_mode<synchronous>, transform_indices = @transform_6, window_bounds = array<i64: 4, 16>}, {pipeline_mode = #tpu.pipeline_mode<synchronous>, transform_indices = @transform_7, window_bounds = array<i64: 16, 4>}, {transform_indices = @transform_8, window_bounds = array<i64: 1, 4, 4>}, {transform_indices = @transform_9, window_bounds = array<i64: 1, 4, 8>}]} {
    %c0 = arith.constant 0 : index
    %c0_0 = arith.constant 0 : index
    %c0_1 = arith.constant 0 : index
    %c0_2 = arith.constant 0 : index
    %0 = vector.load %arg1[%c0, %c0_0, %c0_1, %c0_2] : memref<1x1x16x16xf32, #tpu.memory_space<vmem>>, vector<1x1x16x16xf32>
    %1 = vector.shape_cast %0 : vector<1x1x16x16xf32> to vector<16x16xf32>
    %c0_3 = arith.constant 0 : index
    %c0_4 = arith.constant 0 : index
    %c0_5 = arith.constant 0 : index
    %c0_6 = arith.constant 0 : index
    %2 = vector.load %arg2[%c0_3, %c0_4, %c0_5, %c0_6] : memref<1x1x16x16xf32, #tpu.memory_space<vmem>>, vector<1x1x16x16xf32>
    %3 = vector.shape_cast %2 : vector<1x1x16x16xf32> to vector<16x16xf32>
    %cst = arith.constant 0.000000e+00 : f32
    %4 = vector.broadcast %cst : f32 to vector<16x16xf32>
    %5 = arith.subf %4, %1 : vector<16x16xf32>
    %6 = arith.mulf %5, %5 : vector<16x16xf32>
    %cst_7 = arith.constant 0.000000e+00 : f32
    %7 = vector.broadcast %cst_7 : f32 to vector<16x16xf32>
    %8 = arith.subf %7, %6 : vector<16x16xf32>
    %cst_8 = arith.constant 22.1807098 : f32
    %9 = vector.broadcast %cst_8 : f32 to vector<16x16xf32>
    %10 = arith.mulf %8, %9 : vector<16x16xf32>
    %11 = math.exp %10 : vector<16x16xf32>
    %12 = arith.mulf %3, %11 : vector<16x16xf32>
    %c0_9 = arith.constant 0 : index
    %c0_10 = arith.constant 0 : index
    %13 = vector.load %arg11[%c0_9, %c0_10] : memref<64x16xf32, #tpu.memory_space<vmem>>, vector<16x16xf32>
    tpu.vector_store %arg11[%c0_9, %c0_10], %12 {strides = array<i32>} : memref<64x16xf32, #tpu.memory_space<vmem>>, vector<16x16xf32>,
    %cst_11 = arith.constant 5.000000e-01 : f32
    %14 = vector.broadcast %cst_11 : f32 to vector<16x16xf32>
    %15 = arith.subf %14, %1 : vector<16x16xf32>
    %16 = arith.mulf %15, %15 : vector<16x16xf32>
    %cst_12 = arith.constant 0.000000e+00 : f32
    %17 = vector.broadcast %cst_12 : f32 to vector<16x16xf32>
    %18 = arith.subf %17, %16 : vector<16x16xf32>
    %cst_13 = arith.constant 22.1807098 : f32
    %19 = vector.broadcast %cst_13 : f32 to vector<16x16xf32>
    %20 = arith.mulf %18, %19 : vector<16x16xf32>
    %21 = math.exp %20 : vector<16x16xf32>
    %22 = arith.mulf %3, %21 : vector<16x16xf32>
    %c16 = arith.constant 16 : index
    %c0_14 = arith.constant 0 : index
    %23 = vector.load %arg11[%c16, %c0_14] : memref<64x16xf32, #tpu.memory_space<vmem>>, vector<16x16xf32>
    tpu.vector_store %arg11[%c16, %c0_14], %22 {strides = array<i32>} : memref<64x16xf32, #tpu.memory_space<vmem>>, vector<16x16xf32>,
    %cst_15 = arith.constant 1.000000e+00 : f32
    %24 = vector.broadcast %cst_15 : f32 to vector<16x16xf32>
    %25 = arith.subf %24, %1 : vector<16x16xf32>
    %26 = arith.mulf %25, %25 : vector<16x16xf32>
    %cst_16 = arith.constant 0.000000e+00 : f32
    %27 = vector.broadcast %cst_16 : f32 to vector<16x16xf32>
    %28 = arith.subf %27, %26 : vector<16x16xf32>
    %cst_17 = arith.constant 22.1807098 : f32
    %29 = vector.broadcast %cst_17 : f32 to vector<16x16xf32>
    %30 = arith.mulf %28, %29 : vector<16x16xf32>
    %31 = math.exp %30 : vector<16x16xf32>
    %32 = arith.mulf %3, %31 : vector<16x16xf32>
    %c32 = arith.constant 32 : index
    %c0_18 = arith.constant 0 : index
    %33 = vector.load %arg11[%c32, %c0_18] : memref<64x16xf32, #tpu.memory_space<vmem>>, vector<16x16xf32>
    tpu.vector_store %arg11[%c32, %c0_18], %32 {strides = array<i32>} : memref<64x16xf32, #tpu.memory_space<vmem>>, vector<16x16xf32>,
    %c0_19 = arith.constant 0 : index
    %c0_20 = arith.constant 0 : index
    %c0_21 = arith.constant 0 : index
    %c0_22 = arith.constant 0 : index
    %34 = vector.load %arg2[%c0_19, %c0_20, %c0_21, %c0_22] : memref<1x1x16x16xf32, #tpu.memory_space<vmem>>, vector<1x1x16x16xf32>
    %35 = vector.shape_cast %34 : vector<1x1x16x16xf32> to vector<16x16xf32>
    %c48 = arith.constant 48 : index
    %c0_23 = arith.constant 0 : index
    %36 = vector.load %arg11[%c48, %c0_23] : memref<64x16xf32, #tpu.memory_space<vmem>>, vector<16x16xf32>
    tpu.vector_store %arg11[%c48, %c0_23], %35 {strides = array<i32>} : memref<64x16xf32, #tpu.memory_space<vmem>>, vector<16x16xf32>,
    %c0_24 = arith.constant 0 : index
    %c0_25 = arith.constant 0 : index
    %37 = vector.load %arg11[%c0_24, %c0_25] : memref<64x16xf32, #tpu.memory_space<vmem>>, vector<64x16xf32>
    %c0_26 = arith.constant 0 : index
    %c0_27 = arith.constant 0 : index
    %38 = vector.load %arg5[%c0_26, %c0_27] : memref<16x8xf32, #tpu.memory_space<vmem>>, vector<16x8xf32>
    %cst_28 = arith.constant dense<0.000000e+00> : vector<64x8xf32>
    %39 = tpu.matmul %37, %38, %cst_28 {dimension_numbers = #tpu.dot_dimension_numbers<[1], [0], [0], [1], [0, 0, 1, 1], [], []>} : vector<64x16xf32>, vector<16x8xf32>, vector<64x8xf32> -> vector<64x8xf32>
    %c0_29 = arith.constant 0 : index
    %c0_30 = arith.constant 0 : index
    %40 = vector.load %arg12[%c0_29, %c0_30] : memref<64x8xf32, #tpu.memory_space<vmem>>, vector<64x8xf32>
    tpu.vector_store %arg12[%c0_29, %c0_30], %39 {strides = array<i32>} : memref<64x8xf32, #tpu.memory_space<vmem>>, vector<64x8xf32>,
    %c0_31 = arith.constant 0 : index
    %c0_32 = arith.constant 0 : index
    %41 = vector.load %arg4[%c0_31, %c0_32] : memref<8x16xf32, #tpu.memory_space<vmem>>, vector<8x16xf32>
    %c0_33 = arith.constant 0 : index
    %c0_34 = arith.constant 0 : index
    %42 = vector.load %arg12[%c0_33, %c0_34] : memref<64x8xf32, #tpu.memory_space<vmem>>, vector<16x8xf32>
    %cst_35 = arith.constant dense<0.000000e+00> : vector<8x8xf32>
    %43 = tpu.matmul %41, %42, %cst_35 {dimension_numbers = #tpu.dot_dimension_numbers<[1], [0], [0], [1], [0, 0, 1, 1], [], []>} : vector<8x16xf32>, vector<16x8xf32>, vector<8x8xf32> -> vector<8x8xf32>
    %44 = vector.extract_strided_slice %43 {offsets = [0, 0], sizes = [1, 8], strides = [1, 1]} : vector<8x8xf32> to vector<1x8xf32>
    %c0_36 = arith.constant 0 : index
    %c0_37 = arith.constant 0 : index
    %45 = vector.load %arg13[%c0_36, %c0_37] : memref<4x64xf32, #tpu.memory_space<vmem>>, vector<1x8xf32>
    tpu.vector_store %arg13[%c0_36, %c0_37], %44 {strides = array<i32>} : memref<4x64xf32, #tpu.memory_space<vmem>>, vector<1x8xf32>,
    %46 = vector.extract_strided_slice %43 {offsets = [1, 0], sizes = [1, 8], strides = [1, 1]} : vector<8x8xf32> to vector<1x8xf32>
    %c0_38 = arith.constant 0 : index
    %c8 = arith.constant 8 : index
    %47 = vector.load %arg13[%c0_38, %c8] : memref<4x64xf32, #tpu.memory_space<vmem>>, vector<1x8xf32>
    tpu.vector_store %arg13[%c0_38, %c8], %46 {strides = array<i32>} : memref<4x64xf32, #tpu.memory_space<vmem>>, vector<1x8xf32>,
    %48 = vector.extract_strided_slice %43 {offsets = [2, 0], sizes = [1, 8], strides = [1, 1]} : vector<8x8xf32> to vector<1x8xf32>
    %c0_39 = arith.constant 0 : index
    %c16_40 = arith.constant 16 : index
    %49 = vector.load %arg13[%c0_39, %c16_40] : memref<4x64xf32, #tpu.memory_space<vmem>>, vector<1x8xf32>
    tpu.vector_store %arg13[%c0_39, %c16_40], %48 {strides = array<i32>} : memref<4x64xf32, #tpu.memory_space<vmem>>, vector<1x8xf32>,
    %50 = vector.extract_strided_slice %43 {offsets = [3, 0], sizes = [1, 8], strides = [1, 1]} : vector<8x8xf32> to vector<1x8xf32>
    %c0_41 = arith.constant 0 : index
    %c24 = arith.constant 24 : index
    %51 = vector.load %arg13[%c0_41, %c24] : memref<4x64xf32, #tpu.memory_space<vmem>>, vector<1x8xf32>
    tpu.vector_store %arg13[%c0_41, %c24], %50 {strides = array<i32>} : memref<4x64xf32, #tpu.memory_space<vmem>>, vector<1x8xf32>,
    %52 = vector.extract_strided_slice %43 {offsets = [4, 0], sizes = [1, 8], strides = [1, 1]} : vector<8x8xf32> to vector<1x8xf32>
    %c0_42 = arith.constant 0 : index
    %c32_43 = arith.constant 32 : index
    %53 = vector.load %arg13[%c0_42, %c32_43] : memref<4x64xf32, #tpu.memory_space<vmem>>, vector<1x8xf32>
    tpu.vector_store %arg13[%c0_42, %c32_43], %52 {strides = array<i32>} : memref<4x64xf32, #tpu.memory_space<vmem>>, vector<1x8xf32>,
    %54 = vector.extract_strided_slice %43 {offsets = [5, 0], sizes = [1, 8], strides = [1, 1]} : vector<8x8xf32> to vector<1x8xf32>
    %c0_44 = arith.constant 0 : index
    %c40 = arith.constant 40 : index
    %55 = vector.load %arg13[%c0_44, %c40] : memref<4x64xf32, #tpu.memory_space<vmem>>, vector<1x8xf32>
    tpu.vector_store %arg13[%c0_44, %c40], %54 {strides = array<i32>} : memref<4x64xf32, #tpu.memory_space<vmem>>, vector<1x8xf32>,
    %56 = vector.extract_strided_slice %43 {offsets = [6, 0], sizes = [1, 8], strides = [1, 1]} : vector<8x8xf32> to vector<1x8xf32>
    %c0_45 = arith.constant 0 : index
    %c48_46 = arith.constant 48 : index
    %57 = vector.load %arg13[%c0_45, %c48_46] : memref<4x64xf32, #tpu.memory_space<vmem>>, vector<1x8xf32>
    tpu.vector_store %arg13[%c0_45, %c48_46], %56 {strides = array<i32>} : memref<4x64xf32, #tpu.memory_space<vmem>>, vector<1x8xf32>,
    %58 = vector.extract_strided_slice %43 {offsets = [7, 0], sizes = [1, 8], strides = [1, 1]} : vector<8x8xf32> to vector<1x8xf32>
    %c0_47 = arith.constant 0 : index
    %c56 = arith.constant 56 : index
    %59 = vector.load %arg13[%c0_47, %c56] : memref<4x64xf32, #tpu.memory_space<vmem>>, vector<1x8xf32>
    tpu.vector_store %arg13[%c0_47, %c56], %58 {strides = array<i32>} : memref<4x64xf32, #tpu.memory_space<vmem>>, vector<1x8xf32>,
    %c0_48 = arith.constant 0 : index
    %c0_49 = arith.constant 0 : index
    %60 = vector.load %arg4[%c0_48, %c0_49] : memref<8x16xf32, #tpu.memory_space<vmem>>, vector<8x16xf32>
    %c16_50 = arith.constant 16 : index
    %c0_51 = arith.constant 0 : index
    %61 = vector.load %arg12[%c16_50, %c0_51] : memref<64x8xf32, #tpu.memory_space<vmem>>, vector<16x8xf32>
    %cst_52 = arith.constant dense<0.000000e+00> : vector<8x8xf32>
    %62 = tpu.matmul %60, %61, %cst_52 {dimension_numbers = #tpu.dot_dimension_numbers<[1], [0], [0], [1], [0, 0, 1, 1], [], []>} : vector<8x16xf32>, vector<16x8xf32>, vector<8x8xf32> -> vector<8x8xf32>
    %63 = vector.extract_strided_slice %62 {offsets = [0, 0], sizes = [1, 8], strides = [1, 1]} : vector<8x8xf32> to vector<1x8xf32>
    %c1 = arith.constant 1 : index
    %c0_53 = arith.constant 0 : index
    %64 = vector.load %arg13[%c1, %c0_53] : memref<4x64xf32, #tpu.memory_space<vmem>>, vector<1x8xf32>
    tpu.vector_store %arg13[%c1, %c0_53], %63 {strides = array<i32>} : memref<4x64xf32, #tpu.memory_space<vmem>>, vector<1x8xf32>,
    %65 = vector.extract_strided_slice %62 {offsets = [1, 0], sizes = [1, 8], strides = [1, 1]} : vector<8x8xf32> to vector<1x8xf32>
    %c1_54 = arith.constant 1 : index
    %c8_55 = arith.constant 8 : index
    %66 = vector.load %arg13[%c1_54, %c8_55] : memref<4x64xf32, #tpu.memory_space<vmem>>, vector<1x8xf32>
    tpu.vector_store %arg13[%c1_54, %c8_55], %65 {strides = array<i32>} : memref<4x64xf32, #tpu.memory_space<vmem>>, vector<1x8xf32>,
    %67 = vector.extract_strided_slice %62 {offsets = [2, 0], sizes = [1, 8], strides = [1, 1]} : vector<8x8xf32> to vector<1x8xf32>
    %c1_56 = arith.constant 1 : index
    %c16_57 = arith.constant 16 : index
    %68 = vector.load %arg13[%c1_56, %c16_57] : memref<4x64xf32, #tpu.memory_space<vmem>>, vector<1x8xf32>
    tpu.vector_store %arg13[%c1_56, %c16_57], %67 {strides = array<i32>} : memref<4x64xf32, #tpu.memory_space<vmem>>, vector<1x8xf32>,
    %69 = vector.extract_strided_slice %62 {offsets = [3, 0], sizes = [1, 8], strides = [1, 1]} : vector<8x8xf32> to vector<1x8xf32>
    %c1_58 = arith.constant 1 : index
    %c24_59 = arith.constant 24 : index
    %70 = vector.load %arg13[%c1_58, %c24_59] : memref<4x64xf32, #tpu.memory_space<vmem>>, vector<1x8xf32>
    tpu.vector_store %arg13[%c1_58, %c24_59], %69 {strides = array<i32>} : memref<4x64xf32, #tpu.memory_space<vmem>>, vector<1x8xf32>,
    %71 = vector.extract_strided_slice %62 {offsets = [4, 0], sizes = [1, 8], strides = [1, 1]} : vector<8x8xf32> to vector<1x8xf32>
    %c1_60 = arith.constant 1 : index
    %c32_61 = arith.constant 32 : index
    %72 = vector.load %arg13[%c1_60, %c32_61] : memref<4x64xf32, #tpu.memory_space<vmem>>, vector<1x8xf32>
    tpu.vector_store %arg13[%c1_60, %c32_61], %71 {strides = array<i32>} : memref<4x64xf32, #tpu.memory_space<vmem>>, vector<1x8xf32>,
    %73 = vector.extract_strided_slice %62 {offsets = [5, 0], sizes = [1, 8], strides = [1, 1]} : vector<8x8xf32> to vector<1x8xf32>
    %c1_62 = arith.constant 1 : index
    %c40_63 = arith.constant 40 : index
    %74 = vector.load %arg13[%c1_62, %c40_63] : memref<4x64xf32, #tpu.memory_space<vmem>>, vector<1x8xf32>
    tpu.vector_store %arg13[%c1_62, %c40_63], %73 {strides = array<i32>} : memref<4x64xf32, #tpu.memory_space<vmem>>, vector<1x8xf32>,
    %75 = vector.extract_strided_slice %62 {offsets = [6, 0], sizes = [1, 8], strides = [1, 1]} : vector<8x8xf32> to vector<1x8xf32>
    %c1_64 = arith.constant 1 : index
    %c48_65 = arith.constant 48 : index
    %76 = vector.load %arg13[%c1_64, %c48_65] : memref<4x64xf32, #tpu.memory_space<vmem>>, vector<1x8xf32>
    tpu.vector_store %arg13[%c1_64, %c48_65], %75 {strides = array<i32>} : memref<4x64xf32, #tpu.memory_space<vmem>>, vector<1x8xf32>,
    %77 = vector.extract_strided_slice %62 {offsets = [7, 0], sizes = [1, 8], strides = [1, 1]} : vector<8x8xf32> to vector<1x8xf32>
    %c1_66 = arith.constant 1 : index
    %c56_67 = arith.constant 56 : index
    %78 = vector.load %arg13[%c1_66, %c56_67] : memref<4x64xf32, #tpu.memory_space<vmem>>, vector<1x8xf32>
    tpu.vector_store %arg13[%c1_66, %c56_67], %77 {strides = array<i32>} : memref<4x64xf32, #tpu.memory_space<vmem>>, vector<1x8xf32>,
    %c0_68 = arith.constant 0 : index
    %c0_69 = arith.constant 0 : index
    %79 = vector.load %arg4[%c0_68, %c0_69] : memref<8x16xf32, #tpu.memory_space<vmem>>, vector<8x16xf32>
    %c32_70 = arith.constant 32 : index
    %c0_71 = arith.constant 0 : index
    %80 = vector.load %arg12[%c32_70, %c0_71] : memref<64x8xf32, #tpu.memory_space<vmem>>, vector<16x8xf32>
    %cst_72 = arith.constant dense<0.000000e+00> : vector<8x8xf32>
    %81 = tpu.matmul %79, %80, %cst_72 {dimension_numbers = #tpu.dot_dimension_numbers<[1], [0], [0], [1], [0, 0, 1, 1], [], []>} : vector<8x16xf32>, vector<16x8xf32>, vector<8x8xf32> -> vector<8x8xf32>
    %82 = vector.extract_strided_slice %81 {offsets = [0, 0], sizes = [1, 8], strides = [1, 1]} : vector<8x8xf32> to vector<1x8xf32>
    %c2 = arith.constant 2 : index
    %c0_73 = arith.constant 0 : index
    %83 = vector.load %arg13[%c2, %c0_73] : memref<4x64xf32, #tpu.memory_space<vmem>>, vector<1x8xf32>
    tpu.vector_store %arg13[%c2, %c0_73], %82 {strides = array<i32>} : memref<4x64xf32, #tpu.memory_space<vmem>>, vector<1x8xf32>,
    %84 = vector.extract_strided_slice %81 {offsets = [1, 0], sizes = [1, 8], strides = [1, 1]} : vector<8x8xf32> to vector<1x8xf32>
    %c2_74 = arith.constant 2 : index
    %c8_75 = arith.constant 8 : index
    %85 = vector.load %arg13[%c2_74, %c8_75] : memref<4x64xf32, #tpu.memory_space<vmem>>, vector<1x8xf32>
    tpu.vector_store %arg13[%c2_74, %c8_75], %84 {strides = array<i32>} : memref<4x64xf32, #tpu.memory_space<vmem>>, vector<1x8xf32>,
    %86 = vector.extract_strided_slice %81 {offsets = [2, 0], sizes = [1, 8], strides = [1, 1]} : vector<8x8xf32> to vector<1x8xf32>
    %c2_76 = arith.constant 2 : index
    %c16_77 = arith.constant 16 : index
    %87 = vector.load %arg13[%c2_76, %c16_77] : memref<4x64xf32, #tpu.memory_space<vmem>>, vector<1x8xf32>
    tpu.vector_store %arg13[%c2_76, %c16_77], %86 {strides = array<i32>} : memref<4x64xf32, #tpu.memory_space<vmem>>, vector<1x8xf32>,
    %88 = vector.extract_strided_slice %81 {offsets = [3, 0], sizes = [1, 8], strides = [1, 1]} : vector<8x8xf32> to vector<1x8xf32>
    %c2_78 = arith.constant 2 : index
    %c24_79 = arith.constant 24 : index
    %89 = vector.load %arg13[%c2_78, %c24_79] : memref<4x64xf32, #tpu.memory_space<vmem>>, vector<1x8xf32>
    tpu.vector_store %arg13[%c2_78, %c24_79], %88 {strides = array<i32>} : memref<4x64xf32, #tpu.memory_space<vmem>>, vector<1x8xf32>,
    %90 = vector.extract_strided_slice %81 {offsets = [4, 0], sizes = [1, 8], strides = [1, 1]} : vector<8x8xf32> to vector<1x8xf32>
    %c2_80 = arith.constant 2 : index
    %c32_81 = arith.constant 32 : index
    %91 = vector.load %arg13[%c2_80, %c32_81] : memref<4x64xf32, #tpu.memory_space<vmem>>, vector<1x8xf32>
    tpu.vector_store %arg13[%c2_80, %c32_81], %90 {strides = array<i32>} : memref<4x64xf32, #tpu.memory_space<vmem>>, vector<1x8xf32>,
    %92 = vector.extract_strided_slice %81 {offsets = [5, 0], sizes = [1, 8], strides = [1, 1]} : vector<8x8xf32> to vector<1x8xf32>
    %c2_82 = arith.constant 2 : index
    %c40_83 = arith.constant 40 : index
    %93 = vector.load %arg13[%c2_82, %c40_83] : memref<4x64xf32, #tpu.memory_space<vmem>>, vector<1x8xf32>
    tpu.vector_store %arg13[%c2_82, %c40_83], %92 {strides = array<i32>} : memref<4x64xf32, #tpu.memory_space<vmem>>, vector<1x8xf32>,
    %94 = vector.extract_strided_slice %81 {offsets = [6, 0], sizes = [1, 8], strides = [1, 1]} : vector<8x8xf32> to vector<1x8xf32>
    %c2_84 = arith.constant 2 : index
    %c48_85 = arith.constant 48 : index
    %95 = vector.load %arg13[%c2_84, %c48_85] : memref<4x64xf32, #tpu.memory_space<vmem>>, vector<1x8xf32>
    tpu.vector_store %arg13[%c2_84, %c48_85], %94 {strides = array<i32>} : memref<4x64xf32, #tpu.memory_space<vmem>>, vector<1x8xf32>,
    %96 = vector.extract_strided_slice %81 {offsets = [7, 0], sizes = [1, 8], strides = [1, 1]} : vector<8x8xf32> to vector<1x8xf32>
    %c2_86 = arith.constant 2 : index
    %c56_87 = arith.constant 56 : index
    %97 = vector.load %arg13[%c2_86, %c56_87] : memref<4x64xf32, #tpu.memory_space<vmem>>, vector<1x8xf32>
    tpu.vector_store %arg13[%c2_86, %c56_87], %96 {strides = array<i32>} : memref<4x64xf32, #tpu.memory_space<vmem>>, vector<1x8xf32>,
    %c0_88 = arith.constant 0 : index
    %c0_89 = arith.constant 0 : index
    %98 = vector.load %arg4[%c0_88, %c0_89] : memref<8x16xf32, #tpu.memory_space<vmem>>, vector<8x16xf32>
    %c48_90 = arith.constant 48 : index
    %c0_91 = arith.constant 0 : index
    %99 = vector.load %arg12[%c48_90, %c0_91] : memref<64x8xf32, #tpu.memory_space<vmem>>, vector<16x8xf32>
    %cst_92 = arith.constant dense<0.000000e+00> : vector<8x8xf32>
    %100 = tpu.matmul %98, %99, %cst_92 {dimension_numbers = #tpu.dot_dimension_numbers<[1], [0], [0], [1], [0, 0, 1, 1], [], []>} : vector<8x16xf32>, vector<16x8xf32>, vector<8x8xf32> -> vector<8x8xf32>
    %101 = vector.extract_strided_slice %100 {offsets = [0, 0], sizes = [1, 8], strides = [1, 1]} : vector<8x8xf32> to vector<1x8xf32>
    %c3 = arith.constant 3 : index
    %c0_93 = arith.constant 0 : index
    %102 = vector.load %arg13[%c3, %c0_93] : memref<4x64xf32, #tpu.memory_space<vmem>>, vector<1x8xf32>
    tpu.vector_store %arg13[%c3, %c0_93], %101 {strides = array<i32>} : memref<4x64xf32, #tpu.memory_space<vmem>>, vector<1x8xf32>,
    %103 = vector.extract_strided_slice %100 {offsets = [1, 0], sizes = [1, 8], strides = [1, 1]} : vector<8x8xf32> to vector<1x8xf32>
    %c3_94 = arith.constant 3 : index
    %c8_95 = arith.constant 8 : index
    %104 = vector.load %arg13[%c3_94, %c8_95] : memref<4x64xf32, #tpu.memory_space<vmem>>, vector<1x8xf32>
    tpu.vector_store %arg13[%c3_94, %c8_95], %103 {strides = array<i32>} : memref<4x64xf32, #tpu.memory_space<vmem>>, vector<1x8xf32>,
    %105 = vector.extract_strided_slice %100 {offsets = [2, 0], sizes = [1, 8], strides = [1, 1]} : vector<8x8xf32> to vector<1x8xf32>
    %c3_96 = arith.constant 3 : index
    %c16_97 = arith.constant 16 : index
    %106 = vector.load %arg13[%c3_96, %c16_97] : memref<4x64xf32, #tpu.memory_space<vmem>>, vector<1x8xf32>
    tpu.vector_store %arg13[%c3_96, %c16_97], %105 {strides = array<i32>} : memref<4x64xf32, #tpu.memory_space<vmem>>, vector<1x8xf32>,
    %107 = vector.extract_strided_slice %100 {offsets = [3, 0], sizes = [1, 8], strides = [1, 1]} : vector<8x8xf32> to vector<1x8xf32>
    %c3_98 = arith.constant 3 : index
    %c24_99 = arith.constant 24 : index
    %108 = vector.load %arg13[%c3_98, %c24_99] : memref<4x64xf32, #tpu.memory_space<vmem>>, vector<1x8xf32>
    tpu.vector_store %arg13[%c3_98, %c24_99], %107 {strides = array<i32>} : memref<4x64xf32, #tpu.memory_space<vmem>>, vector<1x8xf32>,
    %109 = vector.extract_strided_slice %100 {offsets = [4, 0], sizes = [1, 8], strides = [1, 1]} : vector<8x8xf32> to vector<1x8xf32>
    %c3_100 = arith.constant 3 : index
    %c32_101 = arith.constant 32 : index
    %110 = vector.load %arg13[%c3_100, %c32_101] : memref<4x64xf32, #tpu.memory_space<vmem>>, vector<1x8xf32>
    tpu.vector_store %arg13[%c3_100, %c32_101], %109 {strides = array<i32>} : memref<4x64xf32, #tpu.memory_space<vmem>>, vector<1x8xf32>,
    %111 = vector.extract_strided_slice %100 {offsets = [5, 0], sizes = [1, 8], strides = [1, 1]} : vector<8x8xf32> to vector<1x8xf32>
    %c3_102 = arith.constant 3 : index
    %c40_103 = arith.constant 40 : index
    %112 = vector.load %arg13[%c3_102, %c40_103] : memref<4x64xf32, #tpu.memory_space<vmem>>, vector<1x8xf32>
    tpu.vector_store %arg13[%c3_102, %c40_103], %111 {strides = array<i32>} : memref<4x64xf32, #tpu.memory_space<vmem>>, vector<1x8xf32>,
    %113 = vector.extract_strided_slice %100 {offsets = [6, 0], sizes = [1, 8], strides = [1, 1]} : vector<8x8xf32> to vector<1x8xf32>
    %c3_104 = arith.constant 3 : index
    %c48_105 = arith.constant 48 : index
    %114 = vector.load %arg13[%c3_104, %c48_105] : memref<4x64xf32, #tpu.memory_space<vmem>>, vector<1x8xf32>
    tpu.vector_store %arg13[%c3_104, %c48_105], %113 {strides = array<i32>} : memref<4x64xf32, #tpu.memory_space<vmem>>, vector<1x8xf32>,
    %115 = vector.extract_strided_slice %100 {offsets = [7, 0], sizes = [1, 8], strides = [1, 1]} : vector<8x8xf32> to vector<1x8xf32>
    %c3_106 = arith.constant 3 : index
    %c56_107 = arith.constant 56 : index
    %116 = vector.load %arg13[%c3_106, %c56_107] : memref<4x64xf32, #tpu.memory_space<vmem>>, vector<1x8xf32>
    tpu.vector_store %arg13[%c3_106, %c56_107], %115 {strides = array<i32>} : memref<4x64xf32, #tpu.memory_space<vmem>>, vector<1x8xf32>,
    %c0_108 = arith.constant 0 : index
    %c0_109 = arith.constant 0 : index
    %117 = vector.load %arg13[%c0_108, %c0_109] : memref<4x64xf32, #tpu.memory_space<vmem>>, vector<4x64xf32>
    %c0_110 = arith.constant 0 : index
    %c0_111 = arith.constant 0 : index
    %c0_112 = arith.constant 0 : index
    %118 = vector.load %arg3[%c0_110, %c0_111, %c0_112] : memref<1x64x4xf32, #tpu.memory_space<vmem>>, vector<1x64x4xf32>
    %119 = vector.shape_cast %118 : vector<1x64x4xf32> to vector<64x4xf32>
    %cst_113 = arith.constant dense<0.000000e+00> : vector<4x4xf32>
    %120 = tpu.matmul %117, %119, %cst_113 {dimension_numbers = #tpu.dot_dimension_numbers<[1], [0], [0], [1], [0, 0, 1, 1], [], []>} : vector<4x64xf32>, vector<64x4xf32>, vector<4x4xf32> -> vector<4x4xf32>
    %cst_114 = arith.constant dense<0.000000e+00> : vector<4xf32>
    %121 = vector.multi_reduction <add>, %117, %cst_114 [1] : vector<4x64xf32> to vector<4xf32>
    %122 = vector.shape_cast %121 : vector<4xf32> to vector<4x1xf32>
    %123 = vector.broadcast %122 : vector<4x1xf32> to vector<4x4xf32>
    %124 = arith.divf %120, %123 : vector<4x4xf32>
    %c0_115 = arith.constant 0 : index
    %c0_116 = arith.constant 0 : index
    %c0_117 = arith.constant 0 : index
    %125 = vector.load %arg9[%c0_115, %c0_116, %c0_117] : memref<1x4x4xf32, #tpu.memory_space<vmem>>, vector<1x4x4xf32>
    %126 = vector.shape_cast %125 : vector<1x4x4xf32> to vector<4x4xf32>
    %127 = vector.shape_cast %124 : vector<4x4xf32> to vector<1x4x4xf32>
    tpu.vector_store %arg9[%c0_115, %c0_116, %c0_117], %127 {strides = array<i32>} : memref<1x4x4xf32, #tpu.memory_space<vmem>>, vector<1x4x4xf32>,
    %c0_118 = arith.constant 0 : index
    %c0_119 = arith.constant 0 : index
    %128 = vector.load %arg11[%c0_118, %c0_119] : memref<64x16xf32, #tpu.memory_space<vmem>>, vector<64x16xf32>
    %c0_120 = arith.constant 0 : index
    %c0_121 = arith.constant 0 : index
    %129 = vector.load %arg8[%c0_120, %c0_121] : memref<16x4xf32, #tpu.memory_space<vmem>>, vector<16x4xf32>
    %cst_122 = arith.constant dense<0.000000e+00> : vector<64x4xf32>
    %130 = tpu.matmul %128, %129, %cst_122 {dimension_numbers = #tpu.dot_dimension_numbers<[1], [0], [0], [1], [0, 0, 1, 1], [], []>} : vector<64x16xf32>, vector<16x4xf32>, vector<64x4xf32> -> vector<64x4xf32>
    %c0_123 = arith.constant 0 : index
    %c0_124 = arith.constant 0 : index
    %131 = vector.load %arg14[%c0_123, %c0_124] : memref<64x4xf32, #tpu.memory_space<vmem>>, vector<64x4xf32>
    tpu.vector_store %arg14[%c0_123, %c0_124], %130 {strides = array<i32>} : memref<64x4xf32, #tpu.memory_space<vmem>>, vector<64x4xf32>,
    %c0_125 = arith.constant 0 : index
    %c0_126 = arith.constant 0 : index
    %132 = vector.load %arg7[%c0_125, %c0_126] : memref<4x16xf32, #tpu.memory_space<vmem>>, vector<4x16xf32>
    %c0_127 = arith.constant 0 : index
    %c0_128 = arith.constant 0 : index
    %133 = vector.load %arg14[%c0_127, %c0_128] : memref<64x4xf32, #tpu.memory_space<vmem>>, vector<16x4xf32>
    %cst_129 = arith.constant dense<0.000000e+00> : vector<4x4xf32>
    %134 = tpu.matmul %132, %133, %cst_129 {dimension_numbers = #tpu.dot_dimension_numbers<[1], [0], [0], [1], [0, 0, 1, 1], [], []>} : vector<4x16xf32>, vector<16x4xf32>, vector<4x4xf32> -> vector<4x4xf32>
    %135 = vector.extract_strided_slice %134 {offsets = [0, 0], sizes = [1, 4], strides = [1, 1]} : vector<4x4xf32> to vector<1x4xf32>
    %c0_130 = arith.constant 0 : index
    %c0_131 = arith.constant 0 : index
    %136 = vector.load %arg15[%c0_130, %c0_131] : memref<4x16xf32, #tpu.memory_space<vmem>>, vector<1x4xf32>
    tpu.vector_store %arg15[%c0_130, %c0_131], %135 {strides = array<i32>} : memref<4x16xf32, #tpu.memory_space<vmem>>, vector<1x4xf32>,
    %137 = vector.extract_strided_slice %134 {offsets = [1, 0], sizes = [1, 4], strides = [1, 1]} : vector<4x4xf32> to vector<1x4xf32>
    %c0_132 = arith.constant 0 : index
    %c4 = arith.constant 4 : index
    %138 = vector.load %arg15[%c0_132, %c4] : memref<4x16xf32, #tpu.memory_space<vmem>>, vector<1x4xf32>
    tpu.vector_store %arg15[%c0_132, %c4], %137 {strides = array<i32>} : memref<4x16xf32, #tpu.memory_space<vmem>>, vector<1x4xf32>,
    %139 = vector.extract_strided_slice %134 {offsets = [2, 0], sizes = [1, 4], strides = [1, 1]} : vector<4x4xf32> to vector<1x4xf32>
    %c0_133 = arith.constant 0 : index
    %c8_134 = arith.constant 8 : index
    %140 = vector.load %arg15[%c0_133, %c8_134] : memref<4x16xf32, #tpu.memory_space<vmem>>, vector<1x4xf32>
    tpu.vector_store %arg15[%c0_133, %c8_134], %139 {strides = array<i32>} : memref<4x16xf32, #tpu.memory_space<vmem>>, vector<1x4xf32>,
    %141 = vector.extract_strided_slice %134 {offsets = [3, 0], sizes = [1, 4], strides = [1, 1]} : vector<4x4xf32> to vector<1x4xf32>
    %c0_135 = arith.constant 0 : index
    %c12 = arith.constant 12 : index
    %142 = vector.load %arg15[%c0_135, %c12] : memref<4x16xf32, #tpu.memory_space<vmem>>, vector<1x4xf32>
    tpu.vector_store %arg15[%c0_135, %c12], %141 {strides = array<i32>} : memref<4x16xf32, #tpu.memory_space<vmem>>, vector<1x4xf32>,
    %c0_136 = arith.constant 0 : index
    %c0_137 = arith.constant 0 : index
    %143 = vector.load %arg7[%c0_136, %c0_137] : memref<4x16xf32, #tpu.memory_space<vmem>>, vector<4x16xf32>
    %c16_138 = arith.constant 16 : index
    %c0_139 = arith.constant 0 : index
    %144 = vector.load %arg14[%c16_138, %c0_139] : memref<64x4xf32, #tpu.memory_space<vmem>>, vector<16x4xf32>
    %cst_140 = arith.constant dense<0.000000e+00> : vector<4x4xf32>
    %145 = tpu.matmul %143, %144, %cst_140 {dimension_numbers = #tpu.dot_dimension_numbers<[1], [0], [0], [1], [0, 0, 1, 1], [], []>} : vector<4x16xf32>, vector<16x4xf32>, vector<4x4xf32> -> vector<4x4xf32>
    %146 = vector.extract_strided_slice %145 {offsets = [0, 0], sizes = [1, 4], strides = [1, 1]} : vector<4x4xf32> to vector<1x4xf32>
    %c1_141 = arith.constant 1 : index
    %c0_142 = arith.constant 0 : index
    %147 = vector.load %arg15[%c1_141, %c0_142] : memref<4x16xf32, #tpu.memory_space<vmem>>, vector<1x4xf32>
    tpu.vector_store %arg15[%c1_141, %c0_142], %146 {strides = array<i32>} : memref<4x16xf32, #tpu.memory_space<vmem>>, vector<1x4xf32>,
    %148 = vector.extract_strided_slice %145 {offsets = [1, 0], sizes = [1, 4], strides = [1, 1]} : vector<4x4xf32> to vector<1x4xf32>
    %c1_143 = arith.constant 1 : index
    %c4_144 = arith.constant 4 : index
    %149 = vector.load %arg15[%c1_143, %c4_144] : memref<4x16xf32, #tpu.memory_space<vmem>>, vector<1x4xf32>
    tpu.vector_store %arg15[%c1_143, %c4_144], %148 {strides = array<i32>} : memref<4x16xf32, #tpu.memory_space<vmem>>, vector<1x4xf32>,
    %150 = vector.extract_strided_slice %145 {offsets = [2, 0], sizes = [1, 4], strides = [1, 1]} : vector<4x4xf32> to vector<1x4xf32>
    %c1_145 = arith.constant 1 : index
    %c8_146 = arith.constant 8 : index
    %151 = vector.load %arg15[%c1_145, %c8_146] : memref<4x16xf32, #tpu.memory_space<vmem>>, vector<1x4xf32>
    tpu.vector_store %arg15[%c1_145, %c8_146], %150 {strides = array<i32>} : memref<4x16xf32, #tpu.memory_space<vmem>>, vector<1x4xf32>,
    %152 = vector.extract_strided_slice %145 {offsets = [3, 0], sizes = [1, 4], strides = [1, 1]} : vector<4x4xf32> to vector<1x4xf32>
    %c1_147 = arith.constant 1 : index
    %c12_148 = arith.constant 12 : index
    %153 = vector.load %arg15[%c1_147, %c12_148] : memref<4x16xf32, #tpu.memory_space<vmem>>, vector<1x4xf32>
    tpu.vector_store %arg15[%c1_147, %c12_148], %152 {strides = array<i32>} : memref<4x16xf32, #tpu.memory_space<vmem>>, vector<1x4xf32>,
    %c0_149 = arith.constant 0 : index
    %c0_150 = arith.constant 0 : index
    %154 = vector.load %arg7[%c0_149, %c0_150] : memref<4x16xf32, #tpu.memory_space<vmem>>, vector<4x16xf32>
    %c32_151 = arith.constant 32 : index
    %c0_152 = arith.constant 0 : index
    %155 = vector.load %arg14[%c32_151, %c0_152] : memref<64x4xf32, #tpu.memory_space<vmem>>, vector<16x4xf32>
    %cst_153 = arith.constant dense<0.000000e+00> : vector<4x4xf32>
    %156 = tpu.matmul %154, %155, %cst_153 {dimension_numbers = #tpu.dot_dimension_numbers<[1], [0], [0], [1], [0, 0, 1, 1], [], []>} : vector<4x16xf32>, vector<16x4xf32>, vector<4x4xf32> -> vector<4x4xf32>
    %157 = vector.extract_strided_slice %156 {offsets = [0, 0], sizes = [1, 4], strides = [1, 1]} : vector<4x4xf32> to vector<1x4xf32>
    %c2_154 = arith.constant 2 : index
    %c0_155 = arith.constant 0 : index
    %158 = vector.load %arg15[%c2_154, %c0_155] : memref<4x16xf32, #tpu.memory_space<vmem>>, vector<1x4xf32>
    tpu.vector_store %arg15[%c2_154, %c0_155], %157 {strides = array<i32>} : memref<4x16xf32, #tpu.memory_space<vmem>>, vector<1x4xf32>,
    %159 = vector.extract_strided_slice %156 {offsets = [1, 0], sizes = [1, 4], strides = [1, 1]} : vector<4x4xf32> to vector<1x4xf32>
    %c2_156 = arith.constant 2 : index
    %c4_157 = arith.constant 4 : index
    %160 = vector.load %arg15[%c2_156, %c4_157] : memref<4x16xf32, #tpu.memory_space<vmem>>, vector<1x4xf32>
    tpu.vector_store %arg15[%c2_156, %c4_157], %159 {strides = array<i32>} : memref<4x16xf32, #tpu.memory_space<vmem>>, vector<1x4xf32>,
    %161 = vector.extract_strided_slice %156 {offsets = [2, 0], sizes = [1, 4], strides = [1, 1]} : vector<4x4xf32> to vector<1x4xf32>
    %c2_158 = arith.constant 2 : index
    %c8_159 = arith.constant 8 : index
    %162 = vector.load %arg15[%c2_158, %c8_159] : memref<4x16xf32, #tpu.memory_space<vmem>>, vector<1x4xf32>
    tpu.vector_store %arg15[%c2_158, %c8_159], %161 {strides = array<i32>} : memref<4x16xf32, #tpu.memory_space<vmem>>, vector<1x4xf32>,
    %163 = vector.extract_strided_slice %156 {offsets = [3, 0], sizes = [1, 4], strides = [1, 1]} : vector<4x4xf32> to vector<1x4xf32>
    %c2_160 = arith.constant 2 : index
    %c12_161 = arith.constant 12 : index
    %164 = vector.load %arg15[%c2_160, %c12_161] : memref<4x16xf32, #tpu.memory_space<vmem>>, vector<1x4xf32>
    tpu.vector_store %arg15[%c2_160, %c12_161], %163 {strides = array<i32>} : memref<4x16xf32, #tpu.memory_space<vmem>>, vector<1x4xf32>,
    %c0_162 = arith.constant 0 : index
    %c0_163 = arith.constant 0 : index
    %165 = vector.load %arg7[%c0_162, %c0_163] : memref<4x16xf32, #tpu.memory_space<vmem>>, vector<4x16xf32>
    %c48_164 = arith.constant 48 : index
    %c0_165 = arith.constant 0 : index
    %166 = vector.load %arg14[%c48_164, %c0_165] : memref<64x4xf32, #tpu.memory_space<vmem>>, vector<16x4xf32>
    %cst_166 = arith.constant dense<0.000000e+00> : vector<4x4xf32>
    %167 = tpu.matmul %165, %166, %cst_166 {dimension_numbers = #tpu.dot_dimension_numbers<[1], [0], [0], [1], [0, 0, 1, 1], [], []>} : vector<4x16xf32>, vector<16x4xf32>, vector<4x4xf32> -> vector<4x4xf32>
    %168 = vector.extract_strided_slice %167 {offsets = [0, 0], sizes = [1, 4], strides = [1, 1]} : vector<4x4xf32> to vector<1x4xf32>
    %c3_167 = arith.constant 3 : index
    %c0_168 = arith.constant 0 : index
    %169 = vector.load %arg15[%c3_167, %c0_168] : memref<4x16xf32, #tpu.memory_space<vmem>>, vector<1x4xf32>
    tpu.vector_store %arg15[%c3_167, %c0_168], %168 {strides = array<i32>} : memref<4x16xf32, #tpu.memory_space<vmem>>, vector<1x4xf32>,
    %170 = vector.extract_strided_slice %167 {offsets = [1, 0], sizes = [1, 4], strides = [1, 1]} : vector<4x4xf32> to vector<1x4xf32>
    %c3_169 = arith.constant 3 : index
    %c4_170 = arith.constant 4 : index
    %171 = vector.load %arg15[%c3_169, %c4_170] : memref<4x16xf32, #tpu.memory_space<vmem>>, vector<1x4xf32>
    tpu.vector_store %arg15[%c3_169, %c4_170], %170 {strides = array<i32>} : memref<4x16xf32, #tpu.memory_space<vmem>>, vector<1x4xf32>,
    %172 = vector.extract_strided_slice %167 {offsets = [2, 0], sizes = [1, 4], strides = [1, 1]} : vector<4x4xf32> to vector<1x4xf32>
    %c3_171 = arith.constant 3 : index
    %c8_172 = arith.constant 8 : index
    %173 = vector.load %arg15[%c3_171, %c8_172] : memref<4x16xf32, #tpu.memory_space<vmem>>, vector<1x4xf32>
    tpu.vector_store %arg15[%c3_171, %c8_172], %172 {strides = array<i32>} : memref<4x16xf32, #tpu.memory_space<vmem>>, vector<1x4xf32>,
    %174 = vector.extract_strided_slice %167 {offsets = [3, 0], sizes = [1, 4], strides = [1, 1]} : vector<4x4xf32> to vector<1x4xf32>
    %c3_173 = arith.constant 3 : index
    %c12_174 = arith.constant 12 : index
    %175 = vector.load %arg15[%c3_173, %c12_174] : memref<4x16xf32, #tpu.memory_space<vmem>>, vector<1x4xf32>
    tpu.vector_store %arg15[%c3_173, %c12_174], %174 {strides = array<i32>} : memref<4x16xf32, #tpu.memory_space<vmem>>, vector<1x4xf32>,
    %c0_175 = arith.constant 0 : index
    %c0_176 = arith.constant 0 : index
    %176 = vector.load %arg15[%c0_175, %c0_176] : memref<4x16xf32, #tpu.memory_space<vmem>>, vector<4x16xf32>
    %c0_177 = arith.constant 0 : index
    %c0_178 = arith.constant 0 : index
    %c0_179 = arith.constant 0 : index
    %177 = vector.load %arg6[%c0_177, %c0_178, %c0_179] : memref<1x16x8xf32, #tpu.memory_space<vmem>>, vector<1x16x8xf32>
    %178 = vector.shape_cast %177 : vector<1x16x8xf32> to vector<16x8xf32>
    %cst_180 = arith.constant dense<0.000000e+00> : vector<4x8xf32>
    %179 = tpu.matmul %176, %178, %cst_180 {dimension_numbers = #tpu.dot_dimension_numbers<[1], [0], [0], [1], [0, 0, 1, 1], [], []>} : vector<4x16xf32>, vector<16x8xf32>, vector<4x8xf32> -> vector<4x8xf32>
    %cst_181 = arith.constant dense<0.000000e+00> : vector<4xf32>
    %180 = vector.multi_reduction <add>, %176, %cst_181 [1] : vector<4x16xf32> to vector<4xf32>
    %181 = vector.shape_cast %180 : vector<4xf32> to vector<4x1xf32>
    %182 = vector.broadcast %181 : vector<4x1xf32> to vector<4x8xf32>
    %183 = arith.divf %179, %182 : vector<4x8xf32>
    %c0_182 = arith.constant 0 : index
    %c0_183 = arith.constant 0 : index
    %c0_184 = arith.constant 0 : index
    %184 = vector.load %arg10[%c0_182, %c0_183, %c0_184] : memref<1x4x8xf32, #tpu.memory_space<vmem>>, vector<1x4x8xf32>
    %185 = vector.shape_cast %184 : vector<1x4x8xf32> to vector<4x8xf32>
    %186 = vector.shape_cast %183 : vector<4x8xf32> to vector<1x4x8xf32>
    tpu.vector_store %arg10[%c0_182, %c0_183, %c0_184], %186 {strides = array<i32>} : memref<1x4x8xf32, #tpu.memory_space<vmem>>, vector<1x4x8xf32>,
    return
  }
  func.func @transform_0(%arg0: i32) -> (i32, i32, i32, i32) {
    %c0_i32 = arith.constant 0 : i32
    %c0_i32_0 = arith.constant 0 : i32
    %c0_i32_1 = arith.constant 0 : i32
    %c0_i32_2 = arith.constant 0 : i32
    return %arg0, %c0_i32, %c0_i32_0, %c0_i32_1 : i32, i32, i32, i32
  }
  func.func @transform_1(%arg0: i32) -> (i32, i32, i32, i32) {
    %c0_i32 = arith.constant 0 : i32
    %c0_i32_0 = arith.constant 0 : i32
    %c0_i32_1 = arith.constant 0 : i32
    %c0_i32_2 = arith.constant 0 : i32
    return %arg0, %c0_i32, %c0_i32_0, %c0_i32_1 : i32, i32, i32, i32
  }
  func.func @transform_2(%arg0: i32) -> (i32, i32, i32) {
    %c0_i32 = arith.constant 0 : i32
    %c0_i32_0 = arith.constant 0 : i32
    %c0_i32_1 = arith.constant 0 : i32
    return %arg0, %c0_i32, %c0_i32_0 : i32, i32, i32
  }
  func.func @transform_3(%arg0: i32) -> (i32, i32) {
    %c0_i32 = arith.constant 0 : i32
    %c0_i32_0 = arith.constant 0 : i32
    %c0_i32_1 = arith.constant 0 : i32
    return %c0_i32, %c0_i32_0 : i32, i32
  }
  func.func @transform_4(%arg0: i32) -> (i32, i32) {
    %c0_i32 = arith.constant 0 : i32
    %c0_i32_0 = arith.constant 0 : i32
    %c0_i32_1 = arith.constant 0 : i32
    return %c0_i32, %c0_i32_0 : i32, i32
  }
  func.func @transform_5(%arg0: i32) -> (i32, i32, i32) {
    %c0_i32 = arith.constant 0 : i32
    %c0_i32_0 = arith.constant 0 : i32
    %c0_i32_1 = arith.constant 0 : i32
    return %arg0, %c0_i32, %c0_i32_0 : i32, i32, i32
  }
  func.func @transform_6(%arg0: i32) -> (i32, i32) {
    %c0_i32 = arith.constant 0 : i32
    %c0_i32_0 = arith.constant 0 : i32
    %c0_i32_1 = arith.constant 0 : i32
    return %c0_i32, %c0_i32_0 : i32, i32
  }
  func.func @transform_7(%arg0: i32) -> (i32, i32) {
    %c0_i32 = arith.constant 0 : i32
    %c0_i32_0 = arith.constant 0 : i32
    %c0_i32_1 = arith.constant 0 : i32
    return %c0_i32, %c0_i32_0 : i32, i32
  }
  func.func @transform_8(%arg0: i32) -> (i32, i32, i32) {
    %c0_i32 = arith.constant 0 : i32
    %c0_i32_0 = arith.constant 0 : i32
    %c0_i32_1 = arith.constant 0 : i32
    return %arg0, %c0_i32, %c0_i32_0 : i32, i32, i32
  }
  func.func @transform_9(%arg0: i32) -> (i32, i32, i32) {
    %c0_i32 = arith.constant 0 : i32
    %c0_i32_0 = arith.constant 0 : i32
    %c0_i32_1 = arith.constant 0 : i32
    return %arg0, %c0_i32, %c0_i32_0 : i32, i32, i32
  }
}

</mosaic_0001>

<llo_original>
// kernel: tpu_custom_call.1
$region0: #{tpu_custom_call.1}
  #allocation0 [shape = 'u32[]', space=smem, size = 0x4, offset = 0x4, fixed_abs, tag = 'smem constant byte address 0x4 - core index']
  #allocation1 [shape = 'u32[144,128]{1,0:T(1,128)}', space=vmem, size = 0x12000, scoped, tag = 'internal scratch']
  #allocation2 [shape = 'f32[64,16]{1,0:T(8,128)}', space=vmem, size = 0x8000, scoped, tag = 'scratch operand']
  #allocation3 [shape = 'f32[64,8]{1,0:T(8,128)}', space=vmem, size = 0x8000, scoped, tag = 'scratch operand']
  #allocation4 [shape = 'f32[4,64]{1,0:T(4,128)}', space=vmem, size = 0x800, scoped, tag = 'scratch operand']
  #allocation5 [shape = 'f32[64,4]{1,0:T(8,128)}', space=vmem, size = 0x8000, scoped, tag = 'scratch operand']
  #allocation6 [shape = 'f32[4,16]{1,0:T(4,128)}', space=vmem, size = 0x800, scoped, tag = 'scratch operand']
  %s0 = inlined_call_operand.vmem [shape: f32[2,1,16,16], index: 0, kind: input, shape index: {}]
  %s1 = inlined_call_operand.vmem [shape: f32[2,1,16,16], index: 1, kind: input, shape index: {}]
  %s2 = inlined_call_operand.vmem [shape: f32[2,64,4], index: 2, kind: input, shape index: {}]
  %s3 = inlined_call_operand.vmem [shape: f32[8,16], index: 3, kind: input, shape index: {}]
  %s4 = inlined_call_operand.vmem [shape: f32[16,8], index: 4, kind: input, shape index: {}]
  %s5 = inlined_call_operand.vmem [shape: f32[2,16,8], index: 5, kind: input, shape index: {}]
  %s6 = inlined_call_operand.vmem [shape: f32[4,16], index: 6, kind: input, shape index: {}]
  %s7 = inlined_call_operand.vmem [shape: f32[16,4], index: 7, kind: input, shape index: {}]
  %s8 = inlined_call_operand.hbm [shape: f32[2,4,4], index: 8, kind: output, shape index: {0}]
  %s9 = inlined_call_operand.hbm [shape: f32[2,4,8], index: 9, kind: output, shape index: {1}]
  %10 = xla_tuple %s8, %s9
  %s11 = sld [smem:[#allocation0]]
  $region73: #{tpu_custom_call.1} parent=0
    _
  %s13 = ssub.s32 1, %s11
  %s14 = scalar_select 0, %s13, %s11
  $region1: #{tpu_custom_call.1} parent=0
    #allocation7 [shape = 'u8[4096]{0}', space=vmem, size = 0x1000, scoped, tag = 'output window, operand 0']
    #allocation8 [shape = 's32[2]{0}', space=sflag, size = 0x8, scoped, tag = 'scoped memory for tpu_custom_call.1']
    #allocation9 [shape = 'u8[4096]{0}', space=vmem, size = 0x1000, scoped, tag = 'output window, operand 1']
    #allocation10 [shape = 's32[2]{0}', space=sflag, size = 0x8, scoped, tag = 'scoped memory for tpu_custom_call.1']
    %15 = vsyncpa [#allocation8], 0
    %s16 = scalar_lea.sflag [#allocation8], 1
    %17 = vsyncpa %s16, 0
    %18 = vsyncpa [#allocation10], 0
    %s19 = scalar_lea.sflag [#allocation10], 1
    %20 = vsyncpa %s19, 0
    loop: start=0, step=1, limit=4
    $region2: #{tpu_custom_call.1} parent=1 // loop_pre_header
      _
    $region3: #{tpu_custom_call.1} parent=1 // loop_header
      %s22 = sphi 0, %s26
      %p23 = scmp.ge.s32.totalorder %s22, 4
      %s32 = sphi 0, %s34
      %s35 = sphi 0, %s32
      %s36 = sphi 0, %s35
      %s52 = sphi 0, %s36
      %s58 = sphi 0, %s60
      %s61 = sphi 0, %s58
      %s62 = sphi 0, %s61
      %s78 = sphi 0, %s62
      %s84 = sphi 0, %s86
      %s87 = sphi 0, %s84
      %s88 = sphi 0, %s87
      %s104 = sphi 0, %s88
      %s108 = sphi 0, %s108
      %s110 = sphi 0, %s108
      %s111 = sphi 0, %s110
      %s125 = sphi 0, %s111
      %s129 = sphi 0, %s129
      %s131 = sphi 0, %s129
      %s132 = sphi 0, %s131
      %s146 = sphi 0, %s132
      %s152 = sphi 0, %s154
      %s155 = sphi 0, %s152
      %s156 = sphi 0, %s155
      %s172 = sphi 0, %s156
      %s176 = sphi 0, %s176
      %s178 = sphi 0, %s176
      %s179 = sphi 0, %s178
      %s193 = sphi 0, %s179
      %s197 = sphi 0, %s197
      %s199 = sphi 0, %s197
      %s200 = sphi 0, %s199
      %s214 = sphi 0, %s200
      %s220 = sphi 0, %s222
      %s223 = sphi 0, %s220
      %s224 = sphi 0, %s223
      %s240 = sphi 0, %s224
      %s246 = sphi 0, %s248
      %s249 = sphi 0, %s246
      %s250 = sphi 0, %s249
      %s266 = sphi 0, %s250
    $region4: #{tpu_custom_call.1} parent=1 // loop_header_branch
      %25 = sbr.rel (%p23) target = $region8
    $region5: #{tpu_custom_call.1} parent=1 // loop_body
      %s27 = ssub.s32 %s22, 1
      %s28 = ssub.s32 %s22, 2
      %s29 = sadd.s32 %s22, 1
      %s30 = ssub.s32 %s22, %s29
      %p31 = scmp.eq.s32.totalorder %s30, 0
      %s33 = sadd.s32 %s32, 1
      %s34 = scalar_select %p31, %s32, %s33
      %p37 = pneg %p31
      %p38 = scmp.eq.s32.totalorder %s22, 1
      %p39 = por %p37, %p38
      %p40 = scmp.ne.s32.totalorder %s32, %s35
      %p41 = scmp.eq.s32.totalorder %s22, 0
      %p42 = por %p40, %p41
      %p43 = scmp.ne.s32.totalorder %s32, %s35
      %p44 = scmp.eq.s32.totalorder %s27, 1
      %p45 = por %p43, %p44
      %p46 = scmp.ne.s32.totalorder %s35, %s36
      %p47 = scmp.eq.s32.totalorder %s27, 0
      %p48 = por %p46, %p47
      %p49 = scmp.ne.s32.totalorder %s35, %s36
      %p50 = scmp.eq.s32.totalorder %s28, 1
      %p51 = por %p49, %p50
      %p53 = scmp.ne.s32.totalorder %s36, %s52
      %p54 = scmp.eq.s32.totalorder %s28, 0
      %p55 = por %p53, %p54
      %s56 = ssub.s32 %s22, %s29
      %p57 = scmp.eq.s32.totalorder %s56, 0
      %s59 = sadd.s32 %s58, 1
      %s60 = scalar_select %p57, %s58, %s59
      %p63 = pneg %p57
      %p64 = scmp.eq.s32.totalorder %s22, 1
      %p65 = por %p63, %p64
      %p66 = scmp.ne.s32.totalorder %s58, %s61
      %p67 = scmp.eq.s32.totalorder %s22, 0
      %p68 = por %p66, %p67
      %p69 = scmp.ne.s32.totalorder %s58, %s61
      %p70 = scmp.eq.s32.totalorder %s27, 1
      %p71 = por %p69, %p70
      %p72 = scmp.ne.s32.totalorder %s61, %s62
      %p73 = scmp.eq.s32.totalorder %s27, 0
      %p74 = por %p72, %p73
      %p75 = scmp.ne.s32.totalorder %s61, %s62
      %p76 = scmp.eq.s32.totalorder %s28, 1
      %p77 = por %p75, %p76
      %p79 = scmp.ne.s32.totalorder %s62, %s78
      %p80 = scmp.eq.s32.totalorder %s28, 0
      %p81 = por %p79, %p80
      %s82 = ssub.s32 %s22, %s29
      %p83 = scmp.eq.s32.totalorder %s82, 0
      %s85 = sadd.s32 %s84, 1
      %s86 = scalar_select %p83, %s84, %s85
      %p89 = pneg %p83
      %p90 = scmp.eq.s32.totalorder %s22, 1
      %p91 = por %p89, %p90
      %p92 = scmp.ne.s32.totalorder %s84, %s87
      %p93 = scmp.eq.s32.totalorder %s22, 0
      %p94 = por %p92, %p93
      %p95 = scmp.ne.s32.totalorder %s84, %s87
      %p96 = scmp.eq.s32.totalorder %s27, 1
      %p97 = por %p95, %p96
      %p98 = scmp.ne.s32.totalorder %s87, %s88
      %p99 = scmp.eq.s32.totalorder %s27, 0
      %p100 = por %p98, %p99
      %p101 = scmp.ne.s32.totalorder %s87, %s88
      %p102 = scmp.eq.s32.totalorder %s28, 1
      %p103 = por %p101, %p102
      %p105 = scmp.ne.s32.totalorder %s88, %s104
      %p106 = scmp.eq.s32.totalorder %s28, 0
      %p107 = por %p105, %p106
      %s109 = sadd.s32 %s108, 1
      %p112 = scmp.eq.s32.totalorder %s22, 1
      %p113 = scmp.ne.s32.totalorder %s108, %s110
      %p114 = scmp.eq.s32.totalorder %s22, 0
      %p115 = por %p113, %p114
      %p116 = scmp.ne.s32.totalorder %s108, %s110
      %p117 = scmp.eq.s32.totalorder %s27, 1
      %p118 = por %p116, %p117
      %p119 = scmp.ne.s32.totalorder %s110, %s111
      %p120 = scmp.eq.s32.totalorder %s27, 0
      %p121 = por %p119, %p120
      %p122 = scmp.ne.s32.totalorder %s110, %s111
      %p123 = scmp.eq.s32.totalorder %s28, 1
      %p124 = por %p122, %p123
      %p126 = scmp.ne.s32.totalorder %s111, %s125
      %p127 = scmp.eq.s32.totalorder %s28, 0
      %p128 = por %p126, %p127
      %s130 = sadd.s32 %s129, 1
      %p133 = scmp.eq.s32.totalorder %s22, 1
      %p134 = scmp.ne.s32.totalorder %s129, %s131
      %p135 = scmp.eq.s32.totalorder %s22, 0
      %p136 = por %p134, %p135
      %p137 = scmp.ne.s32.totalorder %s129, %s131
      %p138 = scmp.eq.s32.totalorder %s27, 1
      %p139 = por %p137, %p138
      %p140 = scmp.ne.s32.totalorder %s131, %s132
      %p141 = scmp.eq.s32.totalorder %s27, 0
      %p142 = por %p140, %p141
      %p143 = scmp.ne.s32.totalorder %s131, %s132
      %p144 = scmp.eq.s32.totalorder %s28, 1
      %p145 = por %p143, %p144
      %p147 = scmp.ne.s32.totalorder %s132, %s146
      %p148 = scmp.eq.s32.totalorder %s28, 0
      %p149 = por %p147, %p148
      %s150 = ssub.s32 %s22, %s29
      %p151 = scmp.eq.s32.totalorder %s150, 0
      %s153 = sadd.s32 %s152, 1
      %s154 = scalar_select %p151, %s152, %s153
      %p157 = pneg %p151
      %p158 = scmp.eq.s32.totalorder %s22, 1
      %p159 = por %p157, %p158
      %p160 = scmp.ne.s32.totalorder %s152, %s155
      %p161 = scmp.eq.s32.totalorder %s22, 0
      %p162 = por %p160, %p161
      %p163 = scmp.ne.s32.totalorder %s152, %s155
      %p164 = scmp.eq.s32.totalorder %s27, 1
      %p165 = por %p163, %p164
      %p166 = scmp.ne.s32.totalorder %s155, %s156
      %p167 = scmp.eq.s32.totalorder %s27, 0
      %p168 = por %p166, %p167
      %p169 = scmp.ne.s32.totalorder %s155, %s156
      %p170 = scmp.eq.s32.totalorder %s28, 1
      %p171 = por %p169, %p170
      %p173 = scmp.ne.s32.totalorder %s156, %s172
      %p174 = scmp.eq.s32.totalorder %s28, 0
      %p175 = por %p173, %p174
      %s177 = sadd.s32 %s176, 1
      %p180 = scmp.eq.s32.totalorder %s22, 1
      %p181 = scmp.ne.s32.totalorder %s176, %s178
      %p182 = scmp.eq.s32.totalorder %s22, 0
      %p183 = por %p181, %p182
      %p184 = scmp.ne.s32.totalorder %s176, %s178
      %p185 = scmp.eq.s32.totalorder %s27, 1
      %p186 = por %p184, %p185
      %p187 = scmp.ne.s32.totalorder %s178, %s179
      %p188 = scmp.eq.s32.totalorder %s27, 0
      %p189 = por %p187, %p188
      %p190 = scmp.ne.s32.totalorder %s178, %s179
      %p191 = scmp.eq.s32.totalorder %s28, 1
      %p192 = por %p190, %p191
      %p194 = scmp.ne.s32.totalorder %s179, %s193
      %p195 = scmp.eq.s32.totalorder %s28, 0
      %p196 = por %p194, %p195
      %s198 = sadd.s32 %s197, 1
      %p201 = scmp.eq.s32.totalorder %s22, 1
      %p202 = scmp.ne.s32.totalorder %s197, %s199
      %p203 = scmp.eq.s32.totalorder %s22, 0
      %p204 = por %p202, %p203
      %p205 = scmp.ne.s32.totalorder %s197, %s199
      %p206 = scmp.eq.s32.totalorder %s27, 1
      %p207 = por %p205, %p206
      %p208 = scmp.ne.s32.totalorder %s199, %s200
      %p209 = scmp.eq.s32.totalorder %s27, 0
      %p210 = por %p208, %p209
      %p211 = scmp.ne.s32.totalorder %s199, %s200
      %p212 = scmp.eq.s32.totalorder %s28, 1
      %p213 = por %p211, %p212
      %p215 = scmp.ne.s32.totalorder %s200, %s214
      %p216 = scmp.eq.s32.totalorder %s28, 0
      %p217 = por %p215, %p216
      %s218 = ssub.s32 %s22, %s29
      %p219 = scmp.eq.s32.totalorder %s218, 0
      %s221 = sadd.s32 %s220, 1
      %s222 = scalar_select %p219, %s220, %s221
      %p225 = pneg %p219
      %p226 = scmp.eq.s32.totalorder %s22, 1
      %p227 = por %p225, %p226
      %p228 = scmp.ne.s32.totalorder %s220, %s223
      %p229 = scmp.eq.s32.totalorder %s22, 0
      %p230 = por %p228, %p229
      %p231 = scmp.ne.s32.totalorder %s220, %s223
      %p232 = scmp.eq.s32.totalorder %s27, 1
      %p233 = por %p231, %p232
      %p234 = scmp.ne.s32.totalorder %s223, %s224
      %p235 = scmp.eq.s32.totalorder %s27, 0
      %p236 = por %p234, %p235
      %p237 = scmp.ne.s32.totalorder %s223, %s224
      %p238 = scmp.eq.s32.totalorder %s28, 1
      %p239 = por %p237, %p238
      %p241 = scmp.ne.s32.totalorder %s224, %s240
      %p242 = scmp.eq.s32.totalorder %s28, 0
      %p243 = por %p241, %p242
      %s244 = ssub.s32 %s22, %s29
      %p245 = scmp.eq.s32.totalorder %s244, 0
      %s247 = sadd.s32 %s246, 1
      %s248 = scalar_select %p245, %s246, %s247
      %p251 = pneg %p245
      %p252 = scmp.eq.s32.totalorder %s22, 1
      %p253 = por %p251, %p252
      %p254 = scmp.ne.s32.totalorder %s246, %s249
      %p255 = scmp.eq.s32.totalorder %s22, 0
      %p256 = por %p254, %p255
      %p257 = scmp.ne.s32.totalorder %s246, %s249
      %p258 = scmp.eq.s32.totalorder %s27, 1
      %p259 = por %p257, %p258
      %p260 = scmp.ne.s32.totalorder %s249, %s250
      %p261 = scmp.eq.s32.totalorder %s27, 0
      %p262 = por %p260, %p261
      %p263 = scmp.ne.s32.totalorder %s249, %s250
      %p264 = scmp.eq.s32.totalorder %s28, 1
      %p265 = por %p263, %p264
      %p267 = scmp.ne.s32.totalorder %s250, %s266
      %p268 = scmp.eq.s32.totalorder %s28, 0
      %p269 = por %p267, %p268
      %p270 = scmp.le.s32.totalorder 1, %s22
      %p271 = scmp.lt.s32.totalorder %s22, 3
      %p272 = pnand %p270, %p271
      %p273 = pneg %p272
      // Predicated region
      $region9: #{tpu_custom_call.1} parent=5 // pred_check
        _
      $region10: #{tpu_custom_call.1} parent=5 // pred_check_branch
        %275 = sbr.rel (%p272) target = $region12
      $region11: #{tpu_custom_call.1} parent=5 // pred_region
        %s276 = ssub.s32 %s22, 1
        // Predicated region
        $region13: #{tpu_custom_call.1} parent=11 // pred_check
          %p277 = pneg %p121
        $region14: #{tpu_custom_call.1} parent=11 // pred_check_branch
          %279 = sbr.rel (%p277) target = $region16
        $region15: #{tpu_custom_call.1} parent=11 // pred_region
          _
        $region16: #{tpu_custom_call.1} parent=11 // pred_fallthru
          _
        // Predicated region
        $region17: #{tpu_custom_call.1} parent=11 // pred_check
          %p280 = pneg %p142
        $region18: #{tpu_custom_call.1} parent=11 // pred_check_branch
          %282 = sbr.rel (%p280) target = $region20
        $region19: #{tpu_custom_call.1} parent=11 // pred_region
          _
        $region20: #{tpu_custom_call.1} parent=11 // pred_fallthru
          _
        // Predicated region
        $region21: #{tpu_custom_call.1} parent=11 // pred_check
          %p283 = pneg %p189
        $region22: #{tpu_custom_call.1} parent=11 // pred_check_branch
          %285 = sbr.rel (%p283) target = $region24
        $region23: #{tpu_custom_call.1} parent=11 // pred_region
          _
        $region24: #{tpu_custom_call.1} parent=11 // pred_fallthru
          _
        // Predicated region
        $region25: #{tpu_custom_call.1} parent=11 // pred_check
          %p286 = pneg %p210
        $region26: #{tpu_custom_call.1} parent=11 // pred_check_branch
          %288 = sbr.rel (%p286) target = $region28
        $region27: #{tpu_custom_call.1} parent=11 // pred_region
          _
        $region28: #{tpu_custom_call.1} parent=11 // pred_fallthru
          _
      $region12: #{tpu_custom_call.1} parent=5 // pred_fallthru
        _
      %p289 = scmp.lt.s32.totalorder %s22, 2
      // Predicated region
      $region29: #{tpu_custom_call.1} parent=5 // pred_check
        %p290 = pneg %p289
      $region30: #{tpu_custom_call.1} parent=5 // pred_check_branch
        %292 = sbr.rel (%p290) target = $region32
      $region31: #{tpu_custom_call.1} parent=5 // pred_region
        // Predicated region
        $region33: #{tpu_custom_call.1} parent=31 // pred_check
          %p293 = pneg %p42
        $region34: #{tpu_custom_call.1} parent=31 // pred_check_branch
          %295 = sbr.rel (%p293) target = $region36
        $region35: #{tpu_custom_call.1} parent=31 // pred_region
          %p296 = scmp.lt.s32.totalorder %s22, 1
          %s297 = scalar_select %p296, %s22, 1
          %s298 = smul.addr %s297, 2
          %s299 = smul.addr %s298, 8
          %s300 = scalar_lea.vmem %s0, %s299
        $region36: #{tpu_custom_call.1} parent=31 // pred_fallthru
          _
        // Predicated region
        $region37: #{tpu_custom_call.1} parent=31 // pred_check
          %p301 = pneg %p68
        $region38: #{tpu_custom_call.1} parent=31 // pred_check_branch
          %303 = sbr.rel (%p301) target = $region40
        $region39: #{tpu_custom_call.1} parent=31 // pred_region
          %p304 = scmp.lt.s32.totalorder %s22, 1
          %s305 = scalar_select %p304, %s22, 1
          %s306 = smul.addr %s305, 2
          %s307 = smul.addr %s306, 8
          %s308 = scalar_lea.vmem %s1, %s307
        $region40: #{tpu_custom_call.1} parent=31 // pred_fallthru
          _
        // Predicated region
        $region41: #{tpu_custom_call.1} parent=31 // pred_check
          %p309 = pneg %p94
        $region42: #{tpu_custom_call.1} parent=31 // pred_check_branch
          %311 = sbr.rel (%p309) target = $region44
        $region43: #{tpu_custom_call.1} parent=31 // pred_region
          %p312 = scmp.lt.s32.totalorder %s22, 1
          %s313 = scalar_select %p312, %s22, 1
          %s314 = smul.addr %s313, 8
          %s315 = smul.addr %s314, 8
          %s316 = scalar_lea.vmem %s2, %s315
        $region44: #{tpu_custom_call.1} parent=31 // pred_fallthru
          _
        // Predicated region
        $region45: #{tpu_custom_call.1} parent=31 // pred_check
          %p317 = pneg %p162
        $region46: #{tpu_custom_call.1} parent=31 // pred_check_branch
          %319 = sbr.rel (%p317) target = $region48
        $region47: #{tpu_custom_call.1} parent=31 // pred_region
          %p320 = scmp.lt.s32.totalorder %s22, 1
          %s321 = scalar_select %p320, %s22, 1
          %s322 = smul.addr %s321, 2
          %s323 = smul.addr %s322, 8
          %s324 = scalar_lea.vmem %s5, %s323
        $region48: #{tpu_custom_call.1} parent=31 // pred_fallthru
          _
      $region32: #{tpu_custom_call.1} parent=5 // pred_fallthru
        _
      %p325 = scmp.le.s32.totalorder 1, %s22
      %p326 = scmp.lt.s32.totalorder %s22, 3
      %p327 = pnand %p325, %p326
      %p328 = pneg %p327
      // Predicated region
      $region49: #{tpu_custom_call.1} parent=5 // pred_check
        _
      $region50: #{tpu_custom_call.1} parent=5 // pred_check_branch
        %330 = sbr.rel (%p327) target = $region52
      $region51: #{tpu_custom_call.1} parent=5 // pred_region
        %s331 = ssub.s32 %s22, 1
        %p332 = scmp.lt.s32.totalorder %s27, 1
        %s333 = scalar_select %p332, %s27, 1
        %s334 = smul.addr %s333, 2
        %s335 = smul.addr %s334, 8
        %s336 = scalar_lea.vmem %s0, %s335
        %p337 = pneg %p48
        %p338 = pneg %p45
        %p339 = scmp.lt.s32.totalorder %s27, 1
        %s340 = scalar_select %p339, %s27, 1
        %s341 = smul.addr %s340, 2
        %s342 = smul.addr %s341, 8
        %s343 = scalar_lea.vmem %s1, %s342
        %p344 = pneg %p74
        %p345 = pneg %p71
        %p346 = scmp.lt.s32.totalorder %s27, 1
        %s347 = scalar_select %p346, %s27, 1
        %s348 = smul.addr %s347, 8
        %s349 = smul.addr %s348, 8
        %s350 = scalar_lea.vmem %s2, %s349
        %p351 = pneg %p100
        %p352 = pneg %p97
        %p353 = pneg %p121
        %p354 = pneg %p118
        %p355 = pneg %p142
        %p356 = pneg %p139
        %p357 = scmp.lt.s32.totalorder %s27, 1
        %s358 = scalar_select %p357, %s27, 1
        %s359 = smul.addr %s358, 2
        %s360 = smul.addr %s359, 8
        %s361 = scalar_lea.vmem %s5, %s360
        %p362 = pneg %p168
        %p363 = pneg %p165
        %p364 = pneg %p189
        %p365 = pneg %p186
        %p366 = pneg %p210
        %p367 = pneg %p207
        %p368 = pneg %p236
        %p369 = pneg %p233
        %s370 = sand.u32 %s223, 1
        %s371 = scalar_lea.sflag [#allocation8], %s370
        %s372 = sand.u32 %s223, 1
        %s373 = smul.addr %s372, 4
        %s374 = scalar_lea.vmem [#allocation7], %s373
        %p375 = pneg %p262
        %p376 = pneg %p259
        %s377 = sand.u32 %s249, 1
        %s378 = scalar_lea.sflag [#allocation10], %s377
        %s379 = sand.u32 %s249, 1
        %s380 = smul.addr %s379, 4
        %s381 = scalar_lea.vmem [#allocation9], %s380
        %p382 = scmp.lt.s32.totalorder %s27, 1
        %s383 = scalar_select %p382, %s27, 1
        %s384 = smul.addr %s383, 2
        %s385 = smul.addr %s384, 8
        %s386 = scalar_lea.vmem %s0, %s385
        %p387 = scmp.lt.s32.totalorder %s27, 1
        %s388 = scalar_select %p387, %s27, 1
        %s389 = smul.addr %s388, 2
        %s390 = smul.addr %s389, 8
        %s391 = scalar_lea.vmem %s1, %s390
        %p392 = scmp.lt.s32.totalorder %s27, 1
        %s393 = scalar_select %p392, %s27, 1
        %s394 = smul.addr %s393, 8
        %s395 = smul.addr %s394, 8
        %s396 = scalar_lea.vmem %s2, %s395
        %p397 = scmp.lt.s32.totalorder %s27, 1
        %s398 = scalar_select %p397, %s27, 1
        %s399 = smul.addr %s398, 2
        %s400 = smul.addr %s399, 8
        %s401 = scalar_lea.vmem %s5, %s400
        %v402 = vld [vmem:[%s386] sm:$0xff]
        %v403 = vld [vmem:[%s386 + $0x8] sm:$0xff]
        %v404 = vld [vmem:[%s391] sm:$0xff]
        %v405 = vld [vmem:[%s391 + $0x8] sm:$0xff]
        %v406 = vsub.f32 0.0, %v402
        %v407 = vsub.f32 0.0, %v403
        %v408 = vmul.f32 %v406, %v406
        %v409 = vmul.f32 %v407, %v407
        %v410 = vsub.f32 0.0, %v408
        %v411 = vsub.f32 0.0, %v409
        %v412 = vmul.f32 %v410, 22.18071
        %v413 = vmul.f32 %v411, 22.18071
        %v414 = vmul.f32 %v412, 1.442695
        %v415 = vpow.pop %v414
        %v416 = vmul.f32 %v413, 1.442695
        %v417 = vpow.pop %v416
        %v418 = vmul.f32 %v404, %v415
        %v419 = vmul.f32 %v405, %v417
        %vm420 = vcmask 130048
        %421 = vst.msk [vmem:[#allocation2] sm:$0xff] %vm420, %v418
        %422 = vst.msk [vmem:[#allocation2 + $0x8] sm:$0xff] %vm420, %v419
        %v423 = vsub.f32 0.5, %v402
        %v424 = vsub.f32 0.5, %v403
        %v425 = vmul.f32 %v423, %v423
        %v426 = vmul.f32 %v424, %v424
        %v427 = vsub.f32 0.0, %v425
        %v428 = vsub.f32 0.0, %v426
        %v429 = vmul.f32 %v427, 22.18071
        %v430 = vmul.f32 %v428, 22.18071
        %v431 = vmul.f32 %v429, 1.442695
        %v432 = vpow.pop %v431
        %v433 = vmul.f32 %v430, 1.442695
        %v434 = vpow.pop %v433
        %v435 = vmul.f32 %v404, %v432
        %v436 = vmul.f32 %v405, %v434
        %437 = vst.msk [vmem:[#allocation2 + $0x10] sm:$0xff] %vm420, %v435
        %438 = vst.msk [vmem:[#allocation2 + $0x18] sm:$0xff] %vm420, %v436
        %v439 = vsub.f32 1.0, %v402
        %v440 = vsub.f32 1.0, %v403
        %v441 = vmul.f32 %v439, %v439
        %v442 = vmul.f32 %v440, %v440
        %v443 = vsub.f32 0.0, %v441
        %v444 = vsub.f32 0.0, %v442
        %v445 = vmul.f32 %v443, 22.18071
        %v446 = vmul.f32 %v444, 22.18071
        %v447 = vmul.f32 %v445, 1.442695
        %v448 = vpow.pop %v447
        %v449 = vmul.f32 %v446, 1.442695
        %v450 = vpow.pop %v449
        %v451 = vmul.f32 %v404, %v448
        %v452 = vmul.f32 %v405, %v450
        %453 = vst.msk [vmem:[#allocation2 + $0x20] sm:$0xff] %vm420, %v451
        %454 = vst.msk [vmem:[#allocation2 + $0x28] sm:$0xff] %vm420, %v452
        %v455 = vld [vmem:[%s391] sm:$0xff]
        %v456 = vld [vmem:[%s391 + $0x8] sm:$0xff]
        %457 = vst.msk [vmem:[#allocation2 + $0x30] sm:$0xff] %vm420, %v455
        %458 = vst.msk [vmem:[#allocation2 + $0x38] sm:$0xff] %vm420, %v456
        %v459 = vld [vmem:[#allocation2] sm:$0xff]
        %v460 = vld [vmem:[#allocation2 + $0x8] sm:$0xff]
        %v461 = vld [vmem:[#allocation2 + $0x10] sm:$0xff]
        %v462 = vld [vmem:[#allocation2 + $0x18] sm:$0xff]
        %v463 = vld [vmem:[#allocation2 + $0x20] sm:$0xff]
        %v464 = vld [vmem:[#allocation2 + $0x28] sm:$0xff]
        %v465 = vld [vmem:[#allocation2 + $0x30] sm:$0xff]
        %v466 = vld [vmem:[#allocation2 + $0x38] sm:$0xff]
        %v467 = vld [vmem:[%s4] sm:$0xff]
        %v468 = vld [vmem:[%s4 + $0x8] sm:$0xff]
        %v470 = vsel %vm420, %v459, 0
        %v473 = vsel %vm420, %v460, 0
        %v476 = vsel %vm420, %v461, 0
        %v479 = vsel %vm420, %v462, 0
        %v482 = vsel %vm420, %v463, 0
        %v485 = vsel %vm420, %v464, 0
        %v488 = vsel %vm420, %v465, 0
        %v491 = vsel %vm420, %v466, 0
        %493 = vmatprep.subr.mxu0 0.0
        %494 = vmatpush1.msra.mxu0 0.0
        %495 = vmatprep.subr.mxu0 0.0
        %496 = vmatpush1.msra.mxu0 0.0
        %497 = vmatprep.subr.mxu0 0.0
        %498 = vmatpush1.msra.mxu0 0.0
        %499 = vmatprep.subr.mxu0 0.0
        %500 = vmatpush1.msra.mxu0 0.0
        %501 = vmatprep.subr.mxu0 0.0
        %502 = vmatpush1.msra.mxu0 0.0
        %503 = vmatprep.subr.mxu0 0.0
        %504 = vmatpush1.msra.mxu0 0.0
        %505 = vmatprep.subr.mxu0 0.0
        %506 = vmatpush1.msra.mxu0 0.0
        %507 = vmatprep.subr.mxu0 0.0
        %508 = vmatpush1.msra.mxu0 0.0
        %509 = vmatprep.subr.mxu0 0.0
        %510 = vmatpush1.msra.mxu0 0.0
        %511 = vmatprep.subr.mxu0 0.0
        %512 = vmatpush1.msra.mxu0 0.0
        %513 = vmatprep.subr.mxu0 0.0
        %514 = vmatpush1.msra.mxu0 0.0
        %515 = vmatprep.subr.mxu0 0.0
        %516 = vmatpush1.msra.mxu0 0.0
        %517 = vmatprep.subr.mxu0 0.0
        %518 = vmatpush1.msra.mxu0 0.0
        %519 = vmatprep.subr.mxu0 0.0
        %520 = vmatpush1.msra.mxu0 0.0
        %521 = vmatprep.subr.mxu0 0.0
        %522 = vmatpush1.msra.mxu0 %v468
        %523 = vmatprep.subr.mxu0 0.0
        %524 = vmatpush1.msra.mxu0 %v467
        %525 = vmatprep.subr.mxu0 0.0
        %526 = vmatpush2.msra.mxu0 0.0
        %527 = vmatprep.subr.mxu0 0.0
        %528 = vmatpush2.msra.mxu0 0.0
        %529 = vmatprep.subr.mxu0 0.0
        %530 = vmatpush2.msra.mxu0 0.0
        %531 = vmatprep.subr.mxu0 0.0
        %532 = vmatpush2.msra.mxu0 0.0
        %533 = vmatprep.subr.mxu0 0.0
        %534 = vmatpush2.msra.mxu0 0.0
        %535 = vmatprep.subr.mxu0 0.0
        %536 = vmatpush2.msra.mxu0 0.0
        %537 = vmatprep.subr.mxu0 0.0
        %538 = vmatpush2.msra.mxu0 0.0
        %539 = vmatprep.subr.mxu0 0.0
        %540 = vmatpush2.msra.mxu0 0.0
        %541 = vmatprep.subr.mxu0 0.0
        %542 = vmatpush2.msra.mxu0 0.0
        %543 = vmatprep.subr.mxu0 0.0
        %544 = vmatpush2.msra.mxu0 0.0
        %545 = vmatprep.subr.mxu0 0.0
        %546 = vmatpush2.msra.mxu0 0.0
        %547 = vmatprep.subr.mxu0 0.0
        %548 = vmatpush2.msra.mxu0 0.0
        %549 = vmatprep.subr.mxu0 0.0
        %550 = vmatpush2.msra.mxu0 0.0
        %551 = vmatprep.subr.mxu0 0.0
        %552 = vmatpush2.msra.mxu0 0.0
        %553 = vmatprep.subr.mxu0 0.0
        %554 = vmatpush2.msra.mxu0 0.0
        %555 = vmatprep.subr.mxu0 0.0
        %556 = vmatpush2.msra.mxu0 0.0
        %557 = vmatprep.mubr.f32.mxu0 0.0
        %558 = vmatmul.mubr.f32.gmra.mxu0 %v470
        %v559 = vpop.f32.mrf.mxu0
        %v560 = vadd.f32 0.0, %v559
        %v561 = vpop.f32.mrf.mxu0
        %562 = vmatprep.mubr.f32.mxu0 0.0
        %563 = vmatmul.mubr.f32.gmra.mxu0 %v473
        %v564 = vpop.f32.mrf.mxu0
        %v565 = vadd.f32 0.0, %v564
        %v566 = vpop.f32.mrf.mxu0
        %567 = vmatprep.mubr.f32.mxu0 0.0
        %568 = vmatmul.mubr.f32.gmra.mxu0 %v476
        %v569 = vpop.f32.mrf.mxu0
        %v570 = vadd.f32 0.0, %v569
        %v571 = vpop.f32.mrf.mxu0
        %572 = vmatprep.mubr.f32.mxu0 0.0
        %573 = vmatmul.mubr.f32.gmra.mxu0 %v479
        %v574 = vpop.f32.mrf.mxu0
        %v575 = vadd.f32 0.0, %v574
        %v576 = vpop.f32.mrf.mxu0
        %577 = vmatprep.mubr.f32.mxu0 0.0
        %578 = vmatmul.mubr.f32.gmra.mxu0 %v482
        %v579 = vpop.f32.mrf.mxu0
        %v580 = vadd.f32 0.0, %v579
        %v581 = vpop.f32.mrf.mxu0
        %582 = vmatprep.mubr.f32.mxu0 0.0
        %583 = vmatmul.mubr.f32.gmra.mxu0 %v485
        %v584 = vpop.f32.mrf.mxu0
        %v585 = vadd.f32 0.0, %v584
        %v586 = vpop.f32.mrf.mxu0
        %587 = vmatprep.mubr.f32.mxu0 0.0
        %588 = vmatmul.mubr.f32.gmra.mxu0 %v488
        %v589 = vpop.f32.mrf.mxu0
        %v590 = vadd.f32 0.0, %v589
        %v591 = vpop.f32.mrf.mxu0
        %592 = vmatprep.mubr.f32.mxu0 0.0
        %593 = vmatmul.mubr.f32.gmra.mxu0 %v491
        %v594 = vpop.f32.mrf.mxu0
        %v595 = vadd.f32 0.0, %v594
        %v596 = vpop.f32.mrf.mxu0
        %597 = vdwg.mxu0
        %vm598 = vcmask 64512
        %599 = vst.msk [vmem:[#allocation3] sm:$0xff] %vm598, %v560
        %600 = vst.msk [vmem:[#allocation3 + $0x8] sm:$0xff] %vm598, %v565
        %601 = vst.msk [vmem:[#allocation3 + $0x10] sm:$0xff] %vm598, %v570
        %602 = vst.msk [vmem:[#allocation3 + $0x18] sm:$0xff] %vm598, %v575
        %603 = vst.msk [vmem:[#allocation3 + $0x20] sm:$0xff] %vm598, %v580
        %604 = vst.msk [vmem:[#allocation3 + $0x28] sm:$0xff] %vm598, %v585
        %605 = vst.msk [vmem:[#allocation3 + $0x30] sm:$0xff] %vm598, %v590
        %606 = vst.msk [vmem:[#allocation3 + $0x38] sm:$0xff] %vm598, %v595
        %v607 = vld [vmem:[%s3] sm:$0xff]
        %v608 = vld [vmem:[#allocation3] sm:$0xff]
        %v609 = vld [vmem:[#allocation3 + $0x8] sm:$0xff]
        %v611 = vsel %vm420, %v607, 0
        %613 = vmatprep.subr.mxu0 0.0
        %614 = vmatpush1.msra.mxu0 0.0
        %615 = vmatprep.subr.mxu0 0.0
        %616 = vmatpush1.msra.mxu0 0.0
        %617 = vmatprep.subr.mxu0 0.0
        %618 = vmatpush1.msra.mxu0 0.0
        %619 = vmatprep.subr.mxu0 0.0
        %620 = vmatpush1.msra.mxu0 0.0
        %621 = vmatprep.subr.mxu0 0.0
        %622 = vmatpush1.msra.mxu0 0.0
        %623 = vmatprep.subr.mxu0 0.0
        %624 = vmatpush1.msra.mxu0 0.0
        %625 = vmatprep.subr.mxu0 0.0
        %626 = vmatpush1.msra.mxu0 0.0
        %627 = vmatprep.subr.mxu0 0.0
        %628 = vmatpush1.msra.mxu0 0.0
        %629 = vmatprep.subr.mxu0 0.0
        %630 = vmatpush1.msra.mxu0 0.0
        %631 = vmatprep.subr.mxu0 0.0
        %632 = vmatpush1.msra.mxu0 0.0
        %633 = vmatprep.subr.mxu0 0.0
        %634 = vmatpush1.msra.mxu0 0.0
        %635 = vmatprep.subr.mxu0 0.0
        %636 = vmatpush1.msra.mxu0 0.0
        %637 = vmatprep.subr.mxu0 0.0
        %638 = vmatpush1.msra.mxu0 0.0
        %639 = vmatprep.subr.mxu0 0.0
        %640 = vmatpush1.msra.mxu0 0.0
        %641 = vmatprep.subr.mxu0 0.0
        %642 = vmatpush1.msra.mxu0 %v609
        %643 = vmatprep.subr.mxu0 0.0
        %644 = vmatpush1.msra.mxu0 %v608
        %645 = vmatprep.subr.mxu0 0.0
        %646 = vmatpush2.msra.mxu0 0.0
        %647 = vmatprep.subr.mxu0 0.0
        %648 = vmatpush2.msra.mxu0 0.0
        %649 = vmatprep.subr.mxu0 0.0
        %650 = vmatpush2.msra.mxu0 0.0
        %651 = vmatprep.subr.mxu0 0.0
        %652 = vmatpush2.msra.mxu0 0.0
        %653 = vmatprep.subr.mxu0 0.0
        %654 = vmatpush2.msra.mxu0 0.0
        %655 = vmatprep.subr.mxu0 0.0
        %656 = vmatpush2.msra.mxu0 0.0
        %657 = vmatprep.subr.mxu0 0.0
        %658 = vmatpush2.msra.mxu0 0.0
        %659 = vmatprep.subr.mxu0 0.0
        %660 = vmatpush2.msra.mxu0 0.0
        %661 = vmatprep.subr.mxu0 0.0
        %662 = vmatpush2.msra.mxu0 0.0
        %663 = vmatprep.subr.mxu0 0.0
        %664 = vmatpush2.msra.mxu0 0.0
        %665 = vmatprep.subr.mxu0 0.0
        %666 = vmatpush2.msra.mxu0 0.0
        %667 = vmatprep.subr.mxu0 0.0
        %668 = vmatpush2.msra.mxu0 0.0
        %669 = vmatprep.subr.mxu0 0.0
        %670 = vmatpush2.msra.mxu0 0.0
        %671 = vmatprep.subr.mxu0 0.0
        %672 = vmatpush2.msra.mxu0 0.0
        %673 = vmatprep.subr.mxu0 0.0
        %674 = vmatpush2.msra.mxu0 0.0
        %675 = vmatprep.subr.mxu0 0.0
        %676 = vmatpush2.msra.mxu0 0.0
        %677 = vmatprep.mubr.f32.mxu0 0.0
        %678 = vmatmul.mubr.f32.gmra.mxu0 %v611
        %v679 = vpop.f32.mrf.mxu0
        %v680 = vadd.f32 0.0, %v679
        %v681 = vpop.f32.mrf.mxu0
        %682 = vdwg.mxu0
        %vm683 = vcmask 57344
        %684 = vst.msk [vmem:[#allocation4] sm:$0x1] %vm683, %v680
        %686 = vrot.lane.b32.xlu0 %v680, 8
        %v687 = vpop.permute.xlu0 %686
        %vm689 = vcmask 123969
        %690 = vst.msk [vmem:[#allocation4 - $0x1] sm:$0x2] %vm689, %v687
        %691 = vrot.lane.b32.xlu0 %v680, 16
        %v692 = vpop.permute.xlu0 %691
        %vm694 = vcmask 190594
        %695 = vst.msk [vmem:[#allocation4 - $0x2] sm:$0x4] %vm694, %v692
        %696 = vrot.lane.b32.xlu0 %v680, 24
        %v697 = vpop.permute.xlu0 %696
        %vm699 = vcmask 257219
        %700 = vst.msk [vmem:[#allocation4 - $0x3] sm:$0x8] %vm699, %v697
        %701 = vrot.lane.b32.xlu0 %v680, 32
        %v702 = vpop.permute.xlu0 %701
        %vm704 = vcmask 323844
        %705 = vst.msk [vmem:[#allocation4 - $0x4] sm:$0x10] %vm704, %v702
        %706 = vrot.lane.b32.xlu0 %v680, 40
        %v707 = vpop.permute.xlu0 %706
        %vm709 = vcmask 390469
        %710 = vst.msk [vmem:[#allocation4 - $0x5] sm:$0x20] %vm709, %v707
        %711 = vrot.lane.b32.xlu0 %v680, 48
        %v712 = vpop.permute.xlu0 %711
        %vm714 = vcmask 457094
        %715 = vst.msk [vmem:[#allocation4 - $0x6] sm:$0x40] %vm714, %v712
        %716 = vrot.lane.b32.xlu0 %v680, 56
        %v717 = vpop.permute.xlu0 %716
        %vm719 = vcmask 523719
        %720 = vst.msk [vmem:[#allocation4 - $0x7] sm:$0x80] %vm719, %v717
        %v721 = vld [vmem:[%s3] sm:$0xff]
        %v722 = vld [vmem:[#allocation3 + $0x10] sm:$0xff]
        %v723 = vld [vmem:[#allocation3 + $0x18] sm:$0xff]
        %v725 = vsel %vm420, %v721, 0
        %727 = vmatprep.subr.mxu0 0.0
        %728 = vmatpush1.msra.mxu0 0.0
        %729 = vmatprep.subr.mxu0 0.0
        %730 = vmatpush1.msra.mxu0 0.0
        %731 = vmatprep.subr.mxu0 0.0
        %732 = vmatpush1.msra.mxu0 0.0
        %733 = vmatprep.subr.mxu0 0.0
        %734 = vmatpush1.msra.mxu0 0.0
        %735 = vmatprep.subr.mxu0 0.0
        %736 = vmatpush1.msra.mxu0 0.0
        %737 = vmatprep.subr.mxu0 0.0
        %738 = vmatpush1.msra.mxu0 0.0
        %739 = vmatprep.subr.mxu0 0.0
        %740 = vmatpush1.msra.mxu0 0.0
        %741 = vmatprep.subr.mxu0 0.0
        %742 = vmatpush1.msra.mxu0 0.0
        %743 = vmatprep.subr.mxu0 0.0
        %744 = vmatpush1.msra.mxu0 0.0
        %745 = vmatprep.subr.mxu0 0.0
        %746 = vmatpush1.msra.mxu0 0.0
        %747 = vmatprep.subr.mxu0 0.0
        %748 = vmatpush1.msra.mxu0 0.0
        %749 = vmatprep.subr.mxu0 0.0
        %750 = vmatpush1.msra.mxu0 0.0
        %751 = vmatprep.subr.mxu0 0.0
        %752 = vmatpush1.msra.mxu0 0.0
        %753 = vmatprep.subr.mxu0 0.0
        %754 = vmatpush1.msra.mxu0 0.0
        %755 = vmatprep.subr.mxu0 0.0
        %756 = vmatpush1.msra.mxu0 %v723
        %757 = vmatprep.subr.mxu0 0.0
        %758 = vmatpush1.msra.mxu0 %v722
        %759 = vmatprep.subr.mxu0 0.0
        %760 = vmatpush2.msra.mxu0 0.0
        %761 = vmatprep.subr.mxu0 0.0
        %762 = vmatpush2.msra.mxu0 0.0
        %763 = vmatprep.subr.mxu0 0.0
        %764 = vmatpush2.msra.mxu0 0.0
        %765 = vmatprep.subr.mxu0 0.0
        %766 = vmatpush2.msra.mxu0 0.0
        %767 = vmatprep.subr.mxu0 0.0
        %768 = vmatpush2.msra.mxu0 0.0
        %769 = vmatprep.subr.mxu0 0.0
        %770 = vmatpush2.msra.mxu0 0.0
        %771 = vmatprep.subr.mxu0 0.0
        %772 = vmatpush2.msra.mxu0 0.0
        %773 = vmatprep.subr.mxu0 0.0
        %774 = vmatpush2.msra.mxu0 0.0
        %775 = vmatprep.subr.mxu0 0.0
        %776 = vmatpush2.msra.mxu0 0.0
        %777 = vmatprep.subr.mxu0 0.0
        %778 = vmatpush2.msra.mxu0 0.0
        %779 = vmatprep.subr.mxu0 0.0
        %780 = vmatpush2.msra.mxu0 0.0
        %781 = vmatprep.subr.mxu0 0.0
        %782 = vmatpush2.msra.mxu0 0.0
        %783 = vmatprep.subr.mxu0 0.0
        %784 = vmatpush2.msra.mxu0 0.0
        %785 = vmatprep.subr.mxu0 0.0
        %786 = vmatpush2.msra.mxu0 0.0
        %787 = vmatprep.subr.mxu0 0.0
        %788 = vmatpush2.msra.mxu0 0.0
        %789 = vmatprep.subr.mxu0 0.0
        %790 = vmatpush2.msra.mxu0 0.0
        %791 = vmatprep.mubr.f32.mxu0 0.0
        %792 = vmatmul.mubr.f32.gmra.mxu0 %v725
        %v793 = vpop.f32.mrf.mxu0
        %v794 = vadd.f32 0.0, %v793
        %v795 = vpop.f32.mrf.mxu0
        %796 = vdwg.mxu0
        %797 = vst.msk [vmem:[#allocation4 + $0x1] sm:$0x1] %vm683, %v794
        %799 = vrot.lane.b32.xlu0 %v794, 8
        %v800 = vpop.permute.xlu0 %799
        %802 = vst.msk [vmem:[#allocation4] sm:$0x2] %vm689, %v800
        %803 = vrot.lane.b32.xlu0 %v794, 16
        %v804 = vpop.permute.xlu0 %803
        %806 = vst.msk [vmem:[#allocation4 - $0x1] sm:$0x4] %vm694, %v804
        %807 = vrot.lane.b32.xlu0 %v794, 24
        %v808 = vpop.permute.xlu0 %807
        %810 = vst.msk [vmem:[#allocation4 - $0x2] sm:$0x8] %vm699, %v808
        %811 = vrot.lane.b32.xlu0 %v794, 32
        %v812 = vpop.permute.xlu0 %811
        %814 = vst.msk [vmem:[#allocation4 - $0x3] sm:$0x10] %vm704, %v812
        %815 = vrot.lane.b32.xlu0 %v794, 40
        %v816 = vpop.permute.xlu0 %815
        %818 = vst.msk [vmem:[#allocation4 - $0x4] sm:$0x20] %vm709, %v816
        %819 = vrot.lane.b32.xlu0 %v794, 48
        %v820 = vpop.permute.xlu0 %819
        %822 = vst.msk [vmem:[#allocation4 - $0x5] sm:$0x40] %vm714, %v820
        %823 = vrot.lane.b32.xlu0 %v794, 56
        %v824 = vpop.permute.xlu0 %823
        %826 = vst.msk [vmem:[#allocation4 - $0x6] sm:$0x80] %vm719, %v824
        %v827 = vld [vmem:[%s3] sm:$0xff]
        %v828 = vld [vmem:[#allocation3 + $0x20] sm:$0xff]
        %v829 = vld [vmem:[#allocation3 + $0x28] sm:$0xff]
        %v831 = vsel %vm420, %v827, 0
        %833 = vmatprep.subr.mxu0 0.0
        %834 = vmatpush1.msra.mxu0 0.0
        %835 = vmatprep.subr.mxu0 0.0
        %836 = vmatpush1.msra.mxu0 0.0
        %837 = vmatprep.subr.mxu0 0.0
        %838 = vmatpush1.msra.mxu0 0.0
        %839 = vmatprep.subr.mxu0 0.0
        %840 = vmatpush1.msra.mxu0 0.0
        %841 = vmatprep.subr.mxu0 0.0
        %842 = vmatpush1.msra.mxu0 0.0
        %843 = vmatprep.subr.mxu0 0.0
        %844 = vmatpush1.msra.mxu0 0.0
        %845 = vmatprep.subr.mxu0 0.0
        %846 = vmatpush1.msra.mxu0 0.0
        %847 = vmatprep.subr.mxu0 0.0
        %848 = vmatpush1.msra.mxu0 0.0
        %849 = vmatprep.subr.mxu0 0.0
        %850 = vmatpush1.msra.mxu0 0.0
        %851 = vmatprep.subr.mxu0 0.0
        %852 = vmatpush1.msra.mxu0 0.0
        %853 = vmatprep.subr.mxu0 0.0
        %854 = vmatpush1.msra.mxu0 0.0
        %855 = vmatprep.subr.mxu0 0.0
        %856 = vmatpush1.msra.mxu0 0.0
        %857 = vmatprep.subr.mxu0 0.0
        %858 = vmatpush1.msra.mxu0 0.0
        %859 = vmatprep.subr.mxu0 0.0
        %860 = vmatpush1.msra.mxu0 0.0
        %861 = vmatprep.subr.mxu0 0.0
        %862 = vmatpush1.msra.mxu0 %v829
        %863 = vmatprep.subr.mxu0 0.0
        %864 = vmatpush1.msra.mxu0 %v828
        %865 = vmatprep.subr.mxu0 0.0
        %866 = vmatpush2.msra.mxu0 0.0
        %867 = vmatprep.subr.mxu0 0.0
        %868 = vmatpush2.msra.mxu0 0.0
        %869 = vmatprep.subr.mxu0 0.0
        %870 = vmatpush2.msra.mxu0 0.0
        %871 = vmatprep.subr.mxu0 0.0
        %872 = vmatpush2.msra.mxu0 0.0
        %873 = vmatprep.subr.mxu0 0.0
        %874 = vmatpush2.msra.mxu0 0.0
        %875 = vmatprep.subr.mxu0 0.0
        %876 = vmatpush2.msra.mxu0 0.0
        %877 = vmatprep.subr.mxu0 0.0
        %878 = vmatpush2.msra.mxu0 0.0
        %879 = vmatprep.subr.mxu0 0.0
        %880 = vmatpush2.msra.mxu0 0.0
        %881 = vmatprep.subr.mxu0 0.0
        %882 = vmatpush2.msra.mxu0 0.0
        %883 = vmatprep.subr.mxu0 0.0
        %884 = vmatpush2.msra.mxu0 0.0
        %885 = vmatprep.subr.mxu0 0.0
        %886 = vmatpush2.msra.mxu0 0.0
        %887 = vmatprep.subr.mxu0 0.0
        %888 = vmatpush2.msra.mxu0 0.0
        %889 = vmatprep.subr.mxu0 0.0
        %890 = vmatpush2.msra.mxu0 0.0
        %891 = vmatprep.subr.mxu0 0.0
        %892 = vmatpush2.msra.mxu0 0.0
        %893 = vmatprep.subr.mxu0 0.0
        %894 = vmatpush2.msra.mxu0 0.0
        %895 = vmatprep.subr.mxu0 0.0
        %896 = vmatpush2.msra.mxu0 0.0
        %897 = vmatprep.mubr.f32.mxu0 0.0
        %898 = vmatmul.mubr.f32.gmra.mxu0 %v831
        %v899 = vpop.f32.mrf.mxu0
        %v900 = vadd.f32 0.0, %v899
        %v901 = vpop.f32.mrf.mxu0
        %902 = vdwg.mxu0
        %903 = vst.msk [vmem:[#allocation4 + $0x2] sm:$0x1] %vm683, %v900
        %905 = vrot.lane.b32.xlu0 %v900, 8
        %v906 = vpop.permute.xlu0 %905
        %908 = vst.msk [vmem:[#allocation4 + $0x1] sm:$0x2] %vm689, %v906
        %909 = vrot.lane.b32.xlu0 %v900, 16
        %v910 = vpop.permute.xlu0 %909
        %912 = vst.msk [vmem:[#allocation4] sm:$0x4] %vm694, %v910
        %913 = vrot.lane.b32.xlu0 %v900, 24
        %v914 = vpop.permute.xlu0 %913
        %916 = vst.msk [vmem:[#allocation4 - $0x1] sm:$0x8] %vm699, %v914
        %917 = vrot.lane.b32.xlu0 %v900, 32
        %v918 = vpop.permute.xlu0 %917
        %920 = vst.msk [vmem:[#allocation4 - $0x2] sm:$0x10] %vm704, %v918
        %921 = vrot.lane.b32.xlu0 %v900, 40
        %v922 = vpop.permute.xlu0 %921
        %924 = vst.msk [vmem:[#allocation4 - $0x3] sm:$0x20] %vm709, %v922
        %925 = vrot.lane.b32.xlu0 %v900, 48
        %v926 = vpop.permute.xlu0 %925
        %928 = vst.msk [vmem:[#allocation4 - $0x4] sm:$0x40] %vm714, %v926
        %929 = vrot.lane.b32.xlu0 %v900, 56
        %v930 = vpop.permute.xlu0 %929
        %932 = vst.msk [vmem:[#allocation4 - $0x5] sm:$0x80] %vm719, %v930
        %v933 = vld [vmem:[%s3] sm:$0xff]
        %v934 = vld [vmem:[#allocation3 + $0x30] sm:$0xff]
        %v935 = vld [vmem:[#allocation3 + $0x38] sm:$0xff]
        %v937 = vsel %vm420, %v933, 0
        %939 = vmatprep.subr.mxu0 0.0
        %940 = vmatpush1.msra.mxu0 0.0
        %941 = vmatprep.subr.mxu0 0.0
        %942 = vmatpush1.msra.mxu0 0.0
        %943 = vmatprep.subr.mxu0 0.0
        %944 = vmatpush1.msra.mxu0 0.0
        %945 = vmatprep.subr.mxu0 0.0
        %946 = vmatpush1.msra.mxu0 0.0
        %947 = vmatprep.subr.mxu0 0.0
        %948 = vmatpush1.msra.mxu0 0.0
        %949 = vmatprep.subr.mxu0 0.0
        %950 = vmatpush1.msra.mxu0 0.0
        %951 = vmatprep.subr.mxu0 0.0
        %952 = vmatpush1.msra.mxu0 0.0
        %953 = vmatprep.subr.mxu0 0.0
        %954 = vmatpush1.msra.mxu0 0.0
        %955 = vmatprep.subr.mxu0 0.0
        %956 = vmatpush1.msra.mxu0 0.0
        %957 = vmatprep.subr.mxu0 0.0
        %958 = vmatpush1.msra.mxu0 0.0
        %959 = vmatprep.subr.mxu0 0.0
        %960 = vmatpush1.msra.mxu0 0.0
        %961 = vmatprep.subr.mxu0 0.0
        %962 = vmatpush1.msra.mxu0 0.0
        %963 = vmatprep.subr.mxu0 0.0
        %964 = vmatpush1.msra.mxu0 0.0
        %965 = vmatprep.subr.mxu0 0.0
        %966 = vmatpush1.msra.mxu0 0.0
        %967 = vmatprep.subr.mxu0 0.0
        %968 = vmatpush1.msra.mxu0 %v935
        %969 = vmatprep.subr.mxu0 0.0
        %970 = vmatpush1.msra.mxu0 %v934
        %971 = vmatprep.subr.mxu0 0.0
        %972 = vmatpush2.msra.mxu0 0.0
        %973 = vmatprep.subr.mxu0 0.0
        %974 = vmatpush2.msra.mxu0 0.0
        %975 = vmatprep.subr.mxu0 0.0
        %976 = vmatpush2.msra.mxu0 0.0
        %977 = vmatprep.subr.mxu0 0.0
        %978 = vmatpush2.msra.mxu0 0.0
        %979 = vmatprep.subr.mxu0 0.0
        %980 = vmatpush2.msra.mxu0 0.0
        %981 = vmatprep.subr.mxu0 0.0
        %982 = vmatpush2.msra.mxu0 0.0
        %983 = vmatprep.subr.mxu0 0.0
        %984 = vmatpush2.msra.mxu0 0.0
        %985 = vmatprep.subr.mxu0 0.0
        %986 = vmatpush2.msra.mxu0 0.0
        %987 = vmatprep.subr.mxu0 0.0
        %988 = vmatpush2.msra.mxu0 0.0
        %989 = vmatprep.subr.mxu0 0.0
        %990 = vmatpush2.msra.mxu0 0.0
        %991 = vmatprep.subr.mxu0 0.0
        %992 = vmatpush2.msra.mxu0 0.0
        %993 = vmatprep.subr.mxu0 0.0
        %994 = vmatpush2.msra.mxu0 0.0
        %995 = vmatprep.subr.mxu0 0.0
        %996 = vmatpush2.msra.mxu0 0.0
        %997 = vmatprep.subr.mxu0 0.0
        %998 = vmatpush2.msra.mxu0 0.0
        %999 = vmatprep.subr.mxu0 0.0
        %1000 = vmatpush2.msra.mxu0 0.0
        %1001 = vmatprep.subr.mxu0 0.0
        %1002 = vmatpush2.msra.mxu0 0.0
        %1003 = vmatprep.mubr.f32.mxu0 0.0
        %1004 = vmatmul.mubr.f32.gmra.mxu0 %v937
        %v1005 = vpop.f32.mrf.mxu0
        %v1006 = vadd.f32 0.0, %v1005
        %v1007 = vpop.f32.mrf.mxu0
        %1008 = vdwg.mxu0
        %1009 = vst.msk [vmem:[#allocation4 + $0x3] sm:$0x1] %vm683, %v1006
        %1011 = vrot.lane.b32.xlu0 %v1006, 8
        %v1012 = vpop.permute.xlu0 %1011
        %1014 = vst.msk [vmem:[#allocation4 + $0x2] sm:$0x2] %vm689, %v1012
        %1015 = vrot.lane.b32.xlu0 %v1006, 16
        %v1016 = vpop.permute.xlu0 %1015
        %1018 = vst.msk [vmem:[#allocation4 + $0x1] sm:$0x4] %vm694, %v1016
        %1019 = vrot.lane.b32.xlu0 %v1006, 24
        %v1020 = vpop.permute.xlu0 %1019
        %1022 = vst.msk [vmem:[#allocation4] sm:$0x8] %vm699, %v1020
        %1023 = vrot.lane.b32.xlu0 %v1006, 32
        %v1024 = vpop.permute.xlu0 %1023
        %1026 = vst.msk [vmem:[#allocation4 - $0x1] sm:$0x10] %vm704, %v1024
        %1027 = vrot.lane.b32.xlu0 %v1006, 40
        %v1028 = vpop.permute.xlu0 %1027
        %1030 = vst.msk [vmem:[#allocation4 - $0x2] sm:$0x20] %vm709, %v1028
        %1031 = vrot.lane.b32.xlu0 %v1006, 48
        %v1032 = vpop.permute.xlu0 %1031
        %1034 = vst.msk [vmem:[#allocation4 - $0x3] sm:$0x40] %vm714, %v1032
        %1035 = vrot.lane.b32.xlu0 %v1006, 56
        %v1036 = vpop.permute.xlu0 %1035
        %1038 = vst.msk [vmem:[#allocation4 - $0x4] sm:$0x80] %vm719, %v1036
        %v1039 = vld [vmem:[#allocation4] sm:$0xf]
        %v1040 = vld [vmem:[%s396] sm:$0xff]
        %v1041 = vld [vmem:[%s396 + $0x8] sm:$0xff]
        %v1042 = vld [vmem:[%s396 + $0x10] sm:$0xff]
        %v1043 = vld [vmem:[%s396 + $0x18] sm:$0xff]
        %v1044 = vld [vmem:[%s396 + $0x20] sm:$0xff]
        %v1045 = vld [vmem:[%s396 + $0x28] sm:$0xff]
        %v1046 = vld [vmem:[%s396 + $0x30] sm:$0xff]
        %v1047 = vld [vmem:[%s396 + $0x38] sm:$0xff]
        %vm1048 = vcmask 523264
        %v1050 = vsel %vm1048, %v1039, 0
        %1052 = vmatprep.subr.mxu0 0.0
        %1053 = vmatpush1.msra.mxu0 0.0
        %1054 = vmatprep.subr.mxu0 0.0
        %1055 = vmatpush1.msra.mxu0 0.0
        %1056 = vmatprep.subr.mxu0 0.0
        %1057 = vmatpush1.msra.mxu0 0.0
        %1058 = vmatprep.subr.mxu0 0.0
        %1059 = vmatpush1.msra.mxu0 0.0
        %1060 = vmatprep.subr.mxu0 0.0
        %1061 = vmatpush1.msra.mxu0 0.0
        %1062 = vmatprep.subr.mxu0 0.0
        %1063 = vmatpush1.msra.mxu0 0.0
        %1064 = vmatprep.subr.mxu0 0.0
        %1065 = vmatpush1.msra.mxu0 0.0
        %1066 = vmatprep.subr.mxu0 0.0
        %1067 = vmatpush1.msra.mxu0 0.0
        %1068 = vmatprep.subr.mxu0 0.0
        %1069 = vmatpush1.msra.mxu0 %v1047
        %1070 = vmatprep.subr.mxu0 0.0
        %1071 = vmatpush1.msra.mxu0 %v1046
        %1072 = vmatprep.subr.mxu0 0.0
        %1073 = vmatpush1.msra.mxu0 %v1045
        %1074 = vmatprep.subr.mxu0 0.0
        %1075 = vmatpush1.msra.mxu0 %v1044
        %1076 = vmatprep.subr.mxu0 0.0
        %1077 = vmatpush1.msra.mxu0 %v1043
        %1078 = vmatprep.subr.mxu0 0.0
        %1079 = vmatpush1.msra.mxu0 %v1042
        %1080 = vmatprep.subr.mxu0 0.0
        %1081 = vmatpush1.msra.mxu0 %v1041
        %1082 = vmatprep.subr.mxu0 0.0
        %1083 = vmatpush1.msra.mxu0 %v1040
        %1084 = vmatprep.subr.mxu0 0.0
        %1085 = vmatpush2.msra.mxu0 0.0
        %1086 = vmatprep.subr.mxu0 0.0
        %1087 = vmatpush2.msra.mxu0 0.0
        %1088 = vmatprep.subr.mxu0 0.0
        %1089 = vmatpush2.msra.mxu0 0.0
        %1090 = vmatprep.subr.mxu0 0.0
        %1091 = vmatpush2.msra.mxu0 0.0
        %1092 = vmatprep.subr.mxu0 0.0
        %1093 = vmatpush2.msra.mxu0 0.0
        %1094 = vmatprep.subr.mxu0 0.0
        %1095 = vmatpush2.msra.mxu0 0.0
        %1096 = vmatprep.subr.mxu0 0.0
        %1097 = vmatpush2.msra.mxu0 0.0
        %1098 = vmatprep.subr.mxu0 0.0
        %1099 = vmatpush2.msra.mxu0 0.0
        %1100 = vmatprep.subr.mxu0 0.0
        %1101 = vmatpush2.msra.mxu0 0.0
        %1102 = vmatprep.subr.mxu0 0.0
        %1103 = vmatpush2.msra.mxu0 0.0
        %1104 = vmatprep.subr.mxu0 0.0
        %1105 = vmatpush2.msra.mxu0 0.0
        %1106 = vmatprep.subr.mxu0 0.0
        %1107 = vmatpush2.msra.mxu0 0.0
        %1108 = vmatprep.subr.mxu0 0.0
        %1109 = vmatpush2.msra.mxu0 0.0
        %1110 = vmatprep.subr.mxu0 0.0
        %1111 = vmatpush2.msra.mxu0 0.0
        %1112 = vmatprep.subr.mxu0 0.0
        %1113 = vmatpush2.msra.mxu0 0.0
        %1114 = vmatprep.subr.mxu0 0.0
        %1115 = vmatpush2.msra.mxu0 0.0
        %1116 = vmatprep.mubr.f32.mxu0 0.0
        %1117 = vmatmul.mubr.f32.gmra.mxu0 %v1050
        %v1118 = vpop.f32.mrf.mxu0
        %v1119 = vadd.f32 0.0, %v1118
        %v1120 = vpop.f32.mrf.mxu0
        %1121 = vdwg.mxu0
        %vm1122 = vcmask 519168
        %v1123 = vsel %vm1122, %v1039, 0.0
        %1124 = vadd.xlane.f32.xlu0 %v1123
        %v1125 = vpop.xlane.xlu0 %1124
        %v1126 = vrcp.pop %v1125
        %v1127 = vmul.f32 %v1119, %v1126
        %vm1128 = vcmask 27648
        %1129 = vst.msk [vmem:[%s374] sm:$0xf] %vm1128, %v1127
        %v1130 = vld [vmem:[#allocation2] sm:$0xff]
        %v1131 = vld [vmem:[#allocation2 + $0x8] sm:$0xff]
        %v1132 = vld [vmem:[#allocation2 + $0x10] sm:$0xff]
        %v1133 = vld [vmem:[#allocation2 + $0x18] sm:$0xff]
        %v1134 = vld [vmem:[#allocation2 + $0x20] sm:$0xff]
        %v1135 = vld [vmem:[#allocation2 + $0x28] sm:$0xff]
        %v1136 = vld [vmem:[#allocation2 + $0x30] sm:$0xff]
        %v1137 = vld [vmem:[#allocation2 + $0x38] sm:$0xff]
        %v1138 = vld [vmem:[%s7] sm:$0xff]
        %v1139 = vld [vmem:[%s7 + $0x8] sm:$0xff]
        %v1141 = vsel %vm420, %v1130, 0
        %v1144 = vsel %vm420, %v1131, 0
        %v1147 = vsel %vm420, %v1132, 0
        %v1150 = vsel %vm420, %v1133, 0
        %v1153 = vsel %vm420, %v1134, 0
        %v1156 = vsel %vm420, %v1135, 0
        %v1159 = vsel %vm420, %v1136, 0
        %v1162 = vsel %vm420, %v1137, 0
        %1164 = vmatprep.subr.mxu0 0.0
        %1165 = vmatpush1.msra.mxu0 0.0
        %1166 = vmatprep.subr.mxu0 0.0
        %1167 = vmatpush1.msra.mxu0 0.0
        %1168 = vmatprep.subr.mxu0 0.0
        %1169 = vmatpush1.msra.mxu0 0.0
        %1170 = vmatprep.subr.mxu0 0.0
        %1171 = vmatpush1.msra.mxu0 0.0
        %1172 = vmatprep.subr.mxu0 0.0
        %1173 = vmatpush1.msra.mxu0 0.0
        %1174 = vmatprep.subr.mxu0 0.0
        %1175 = vmatpush1.msra.mxu0 0.0
        %1176 = vmatprep.subr.mxu0 0.0
        %1177 = vmatpush1.msra.mxu0 0.0
        %1178 = vmatprep.subr.mxu0 0.0
        %1179 = vmatpush1.msra.mxu0 0.0
        %1180 = vmatprep.subr.mxu0 0.0
        %1181 = vmatpush1.msra.mxu0 0.0
        %1182 = vmatprep.subr.mxu0 0.0
        %1183 = vmatpush1.msra.mxu0 0.0
        %1184 = vmatprep.subr.mxu0 0.0
        %1185 = vmatpush1.msra.mxu0 0.0
        %1186 = vmatprep.subr.mxu0 0.0
        %1187 = vmatpush1.msra.mxu0 0.0
        %1188 = vmatprep.subr.mxu0 0.0
        %1189 = vmatpush1.msra.mxu0 0.0
        %1190 = vmatprep.subr.mxu0 0.0
        %1191 = vmatpush1.msra.mxu0 0.0
        %1192 = vmatprep.subr.mxu0 0.0
        %1193 = vmatpush1.msra.mxu0 %v1139
        %1194 = vmatprep.subr.mxu0 0.0
        %1195 = vmatpush1.msra.mxu0 %v1138
        %1196 = vmatprep.subr.mxu0 0.0
        %1197 = vmatpush2.msra.mxu0 0.0
        %1198 = vmatprep.subr.mxu0 0.0
        %1199 = vmatpush2.msra.mxu0 0.0
        %1200 = vmatprep.subr.mxu0 0.0
        %1201 = vmatpush2.msra.mxu0 0.0
        %1202 = vmatprep.subr.mxu0 0.0
        %1203 = vmatpush2.msra.mxu0 0.0
        %1204 = vmatprep.subr.mxu0 0.0
        %1205 = vmatpush2.msra.mxu0 0.0
        %1206 = vmatprep.subr.mxu0 0.0
        %1207 = vmatpush2.msra.mxu0 0.0
        %1208 = vmatprep.subr.mxu0 0.0
        %1209 = vmatpush2.msra.mxu0 0.0
        %1210 = vmatprep.subr.mxu0 0.0
        %1211 = vmatpush2.msra.mxu0 0.0
        %1212 = vmatprep.subr.mxu0 0.0
        %1213 = vmatpush2.msra.mxu0 0.0
        %1214 = vmatprep.subr.mxu0 0.0
        %1215 = vmatpush2.msra.mxu0 0.0
        %1216 = vmatprep.subr.mxu0 0.0
        %1217 = vmatpush2.msra.mxu0 0.0
        %1218 = vmatprep.subr.mxu0 0.0
        %1219 = vmatpush2.msra.mxu0 0.0
        %1220 = vmatprep.subr.mxu0 0.0
        %1221 = vmatpush2.msra.mxu0 0.0
        %1222 = vmatprep.subr.mxu0 0.0
        %1223 = vmatpush2.msra.mxu0 0.0
        %1224 = vmatprep.subr.mxu0 0.0
        %1225 = vmatpush2.msra.mxu0 0.0
        %1226 = vmatprep.subr.mxu0 0.0
        %1227 = vmatpush2.msra.mxu0 0.0
        %1228 = vmatprep.mubr.f32.mxu0 0.0
        %1229 = vmatmul.mubr.f32.gmra.mxu0 %v1141
        %v1230 = vpop.f32.mrf.mxu0
        %v1231 = vadd.f32 0.0, %v1230
        %v1232 = vpop.f32.mrf.mxu0
        %1233 = vmatprep.mubr.f32.mxu0 0.0
        %1234 = vmatmul.mubr.f32.gmra.mxu0 %v1144
        %v1235 = vpop.f32.mrf.mxu0
        %v1236 = vadd.f32 0.0, %v1235
        %v1237 = vpop.f32.mrf.mxu0
        %1238 = vmatprep.mubr.f32.mxu0 0.0
        %1239 = vmatmul.mubr.f32.gmra.mxu0 %v1147
        %v1240 = vpop.f32.mrf.mxu0
        %v1241 = vadd.f32 0.0, %v1240
        %v1242 = vpop.f32.mrf.mxu0
        %1243 = vmatprep.mubr.f32.mxu0 0.0
        %1244 = vmatmul.mubr.f32.gmra.mxu0 %v1150
        %v1245 = vpop.f32.mrf.mxu0
        %v1246 = vadd.f32 0.0, %v1245
        %v1247 = vpop.f32.mrf.mxu0
        %1248 = vmatprep.mubr.f32.mxu0 0.0
        %1249 = vmatmul.mubr.f32.gmra.mxu0 %v1153
        %v1250 = vpop.f32.mrf.mxu0
        %v1251 = vadd.f32 0.0, %v1250
        %v1252 = vpop.f32.mrf.mxu0
        %1253 = vmatprep.mubr.f32.mxu0 0.0
        %1254 = vmatmul.mubr.f32.gmra.mxu0 %v1156
        %v1255 = vpop.f32.mrf.mxu0
        %v1256 = vadd.f32 0.0, %v1255
        %v1257 = vpop.f32.mrf.mxu0
        %1258 = vmatprep.mubr.f32.mxu0 0.0
        %1259 = vmatmul.mubr.f32.gmra.mxu0 %v1159
        %v1260 = vpop.f32.mrf.mxu0
        %v1261 = vadd.f32 0.0, %v1260
        %v1262 = vpop.f32.mrf.mxu0
        %1263 = vmatprep.mubr.f32.mxu0 0.0
        %1264 = vmatmul.mubr.f32.gmra.mxu0 %v1162
        %v1265 = vpop.f32.mrf.mxu0
        %v1266 = vadd.f32 0.0, %v1265
        %v1267 = vpop.f32.mrf.mxu0
        %1268 = vdwg.mxu0
        %vm1269 = vcmask 31744
        %1270 = vst.msk [vmem:[#allocation5] sm:$0xff] %vm1269, %v1231
        %1271 = vst.msk [vmem:[#allocation5 + $0x8] sm:$0xff] %vm1269, %v1236
        %1272 = vst.msk [vmem:[#allocation5 + $0x10] sm:$0xff] %vm1269, %v1241
        %1273 = vst.msk [vmem:[#allocation5 + $0x18] sm:$0xff] %vm1269, %v1246
        %1274 = vst.msk [vmem:[#allocation5 + $0x20] sm:$0xff] %vm1269, %v1251
        %1275 = vst.msk [vmem:[#allocation5 + $0x28] sm:$0xff] %vm1269, %v1256
        %1276 = vst.msk [vmem:[#allocation5 + $0x30] sm:$0xff] %vm1269, %v1261
        %1277 = vst.msk [vmem:[#allocation5 + $0x38] sm:$0xff] %vm1269, %v1266
        %v1278 = vld [vmem:[%s6] sm:$0xf]
        %v1279 = vld [vmem:[#allocation5] sm:$0xff]
        %v1280 = vld [vmem:[#allocation5 + $0x8] sm:$0xff]
        %v1282 = vsel %vm420, %v1278, 0
        %1284 = vmatprep.subr.mxu0 0.0
        %1285 = vmatpush1.msra.mxu0 0.0
        %1286 = vmatprep.subr.mxu0 0.0
        %1287 = vmatpush1.msra.mxu0 0.0
        %1288 = vmatprep.subr.mxu0 0.0
        %1289 = vmatpush1.msra.mxu0 0.0
        %1290 = vmatprep.subr.mxu0 0.0
        %1291 = vmatpush1.msra.mxu0 0.0
        %1292 = vmatprep.subr.mxu0 0.0
        %1293 = vmatpush1.msra.mxu0 0.0
        %1294 = vmatprep.subr.mxu0 0.0
        %1295 = vmatpush1.msra.mxu0 0.0
        %1296 = vmatprep.subr.mxu0 0.0
        %1297 = vmatpush1.msra.mxu0 0.0
        %1298 = vmatprep.subr.mxu0 0.0
        %1299 = vmatpush1.msra.mxu0 0.0
        %1300 = vmatprep.subr.mxu0 0.0
        %1301 = vmatpush1.msra.mxu0 0.0
        %1302 = vmatprep.subr.mxu0 0.0
        %1303 = vmatpush1.msra.mxu0 0.0
        %1304 = vmatprep.subr.mxu0 0.0
        %1305 = vmatpush1.msra.mxu0 0.0
        %1306 = vmatprep.subr.mxu0 0.0
        %1307 = vmatpush1.msra.mxu0 0.0
        %1308 = vmatprep.subr.mxu0 0.0
        %1309 = vmatpush1.msra.mxu0 0.0
        %1310 = vmatprep.subr.mxu0 0.0
        %1311 = vmatpush1.msra.mxu0 0.0
        %1312 = vmatprep.subr.mxu0 0.0
        %1313 = vmatpush1.msra.mxu0 %v1280
        %1314 = vmatprep.subr.mxu0 0.0
        %1315 = vmatpush1.msra.mxu0 %v1279
        %1316 = vmatprep.subr.mxu0 0.0
        %1317 = vmatpush2.msra.mxu0 0.0
        %1318 = vmatprep.subr.mxu0 0.0
        %1319 = vmatpush2.msra.mxu0 0.0
        %1320 = vmatprep.subr.mxu0 0.0
        %1321 = vmatpush2.msra.mxu0 0.0
        %1322 = vmatprep.subr.mxu0 0.0
        %1323 = vmatpush2.msra.mxu0 0.0
        %1324 = vmatprep.subr.mxu0 0.0
        %1325 = vmatpush2.msra.mxu0 0.0
        %1326 = vmatprep.subr.mxu0 0.0
        %1327 = vmatpush2.msra.mxu0 0.0
        %1328 = vmatprep.subr.mxu0 0.0
        %1329 = vmatpush2.msra.mxu0 0.0
        %1330 = vmatprep.subr.mxu0 0.0
        %1331 = vmatpush2.msra.mxu0 0.0
        %1332 = vmatprep.subr.mxu0 0.0
        %1333 = vmatpush2.msra.mxu0 0.0
        %1334 = vmatprep.subr.mxu0 0.0
        %1335 = vmatpush2.msra.mxu0 0.0
        %1336 = vmatprep.subr.mxu0 0.0
        %1337 = vmatpush2.msra.mxu0 0.0
        %1338 = vmatprep.subr.mxu0 0.0
        %1339 = vmatpush2.msra.mxu0 0.0
        %1340 = vmatprep.subr.mxu0 0.0
        %1341 = vmatpush2.msra.mxu0 0.0
        %1342 = vmatprep.subr.mxu0 0.0
        %1343 = vmatpush2.msra.mxu0 0.0
        %1344 = vmatprep.subr.mxu0 0.0
        %1345 = vmatpush2.msra.mxu0 0.0
        %1346 = vmatprep.subr.mxu0 0.0
        %1347 = vmatpush2.msra.mxu0 0.0
        %1348 = vmatprep.mubr.f32.mxu0 0.0
        %1349 = vmatmul.mubr.f32.gmra.mxu0 %v1282
        %v1350 = vpop.f32.mrf.mxu0
        %v1351 = vadd.f32 0.0, %v1350
        %v1352 = vpop.f32.mrf.mxu0
        %1353 = vdwg.mxu0
        %vm1354 = vcmask 24576
        %1355 = vst.msk [vmem:[#allocation6] sm:$0x1] %vm1354, %v1351
        %1357 = vrot.lane.b32.xlu0 %v1351, 4
        %v1358 = vpop.permute.xlu0 %1357
        %vm1360 = vcmask 58401
        %1361 = vst.msk [vmem:[#allocation6 - $0x1] sm:$0x2] %vm1360, %v1358
        %1362 = vrot.lane.b32.xlu0 %v1351, 8
        %v1363 = vpop.permute.xlu0 %1362
        %vm1365 = vcmask 92226
        %1366 = vst.msk [vmem:[#allocation6 - $0x2] sm:$0x4] %vm1365, %v1363
        %1367 = vrot.lane.b32.xlu0 %v1351, 12
        %v1368 = vpop.permute.xlu0 %1367
        %vm1370 = vcmask 126051
        %1371 = vst.msk [vmem:[#allocation6 - $0x3] sm:$0x8] %vm1370, %v1368
        %v1372 = vld [vmem:[%s6] sm:$0xf]
        %v1373 = vld [vmem:[#allocation5 + $0x10] sm:$0xff]
        %v1374 = vld [vmem:[#allocation5 + $0x18] sm:$0xff]
        %v1376 = vsel %vm420, %v1372, 0
        %1378 = vmatprep.subr.mxu0 0.0
        %1379 = vmatpush1.msra.mxu0 0.0
        %1380 = vmatprep.subr.mxu0 0.0
        %1381 = vmatpush1.msra.mxu0 0.0
        %1382 = vmatprep.subr.mxu0 0.0
        %1383 = vmatpush1.msra.mxu0 0.0
        %1384 = vmatprep.subr.mxu0 0.0
        %1385 = vmatpush1.msra.mxu0 0.0
        %1386 = vmatprep.subr.mxu0 0.0
        %1387 = vmatpush1.msra.mxu0 0.0
        %1388 = vmatprep.subr.mxu0 0.0
        %1389 = vmatpush1.msra.mxu0 0.0
        %1390 = vmatprep.subr.mxu0 0.0
        %1391 = vmatpush1.msra.mxu0 0.0
        %1392 = vmatprep.subr.mxu0 0.0
        %1393 = vmatpush1.msra.mxu0 0.0
        %1394 = vmatprep.subr.mxu0 0.0
        %1395 = vmatpush1.msra.mxu0 0.0
        %1396 = vmatprep.subr.mxu0 0.0
        %1397 = vmatpush1.msra.mxu0 0.0
        %1398 = vmatprep.subr.mxu0 0.0
        %1399 = vmatpush1.msra.mxu0 0.0
        %1400 = vmatprep.subr.mxu0 0.0
        %1401 = vmatpush1.msra.mxu0 0.0
        %1402 = vmatprep.subr.mxu0 0.0
        %1403 = vmatpush1.msra.mxu0 0.0
        %1404 = vmatprep.subr.mxu0 0.0
        %1405 = vmatpush1.msra.mxu0 0.0
        %1406 = vmatprep.subr.mxu0 0.0
        %1407 = vmatpush1.msra.mxu0 %v1374
        %1408 = vmatprep.subr.mxu0 0.0
        %1409 = vmatpush1.msra.mxu0 %v1373
        %1410 = vmatprep.subr.mxu0 0.0
        %1411 = vmatpush2.msra.mxu0 0.0
        %1412 = vmatprep.subr.mxu0 0.0
        %1413 = vmatpush2.msra.mxu0 0.0
        %1414 = vmatprep.subr.mxu0 0.0
        %1415 = vmatpush2.msra.mxu0 0.0
        %1416 = vmatprep.subr.mxu0 0.0
        %1417 = vmatpush2.msra.mxu0 0.0
        %1418 = vmatprep.subr.mxu0 0.0
        %1419 = vmatpush2.msra.mxu0 0.0
        %1420 = vmatprep.subr.mxu0 0.0
        %1421 = vmatpush2.msra.mxu0 0.0
        %1422 = vmatprep.subr.mxu0 0.0
        %1423 = vmatpush2.msra.mxu0 0.0
        %1424 = vmatprep.subr.mxu0 0.0
        %1425 = vmatpush2.msra.mxu0 0.0
        %1426 = vmatprep.subr.mxu0 0.0
        %1427 = vmatpush2.msra.mxu0 0.0
        %1428 = vmatprep.subr.mxu0 0.0
        %1429 = vmatpush2.msra.mxu0 0.0
        %1430 = vmatprep.subr.mxu0 0.0
        %1431 = vmatpush2.msra.mxu0 0.0
        %1432 = vmatprep.subr.mxu0 0.0
        %1433 = vmatpush2.msra.mxu0 0.0
        %1434 = vmatprep.subr.mxu0 0.0
        %1435 = vmatpush2.msra.mxu0 0.0
        %1436 = vmatprep.subr.mxu0 0.0
        %1437 = vmatpush2.msra.mxu0 0.0
        %1438 = vmatprep.subr.mxu0 0.0
        %1439 = vmatpush2.msra.mxu0 0.0
        %1440 = vmatprep.subr.mxu0 0.0
        %1441 = vmatpush2.msra.mxu0 0.0
        %1442 = vmatprep.mubr.f32.mxu0 0.0
        %1443 = vmatmul.mubr.f32.gmra.mxu0 %v1376
        %v1444 = vpop.f32.mrf.mxu0
        %v1445 = vadd.f32 0.0, %v1444
        %v1446 = vpop.f32.mrf.mxu0
        %1447 = vdwg.mxu0
        %1448 = vst.msk [vmem:[#allocation6 + $0x1] sm:$0x1] %vm1354, %v1445
        %1450 = vrot.lane.b32.xlu0 %v1445, 4
        %v1451 = vpop.permute.xlu0 %1450
        %1453 = vst.msk [vmem:[#allocation6] sm:$0x2] %vm1360, %v1451
        %1454 = vrot.lane.b32.xlu0 %v1445, 8
        %v1455 = vpop.permute.xlu0 %1454
        %1457 = vst.msk [vmem:[#allocation6 - $0x1] sm:$0x4] %vm1365, %v1455
        %1458 = vrot.lane.b32.xlu0 %v1445, 12
        %v1459 = vpop.permute.xlu0 %1458
        %1461 = vst.msk [vmem:[#allocation6 - $0x2] sm:$0x8] %vm1370, %v1459
        %v1462 = vld [vmem:[%s6] sm:$0xf]
        %v1463 = vld [vmem:[#allocation5 + $0x20] sm:$0xff]
        %v1464 = vld [vmem:[#allocation5 + $0x28] sm:$0xff]
        %v1466 = vsel %vm420, %v1462, 0
        %1468 = vmatprep.subr.mxu0 0.0
        %1469 = vmatpush1.msra.mxu0 0.0
        %1470 = vmatprep.subr.mxu0 0.0
        %1471 = vmatpush1.msra.mxu0 0.0
        %1472 = vmatprep.subr.mxu0 0.0
        %1473 = vmatpush1.msra.mxu0 0.0
        %1474 = vmatprep.subr.mxu0 0.0
        %1475 = vmatpush1.msra.mxu0 0.0
        %1476 = vmatprep.subr.mxu0 0.0
        %1477 = vmatpush1.msra.mxu0 0.0
        %1478 = vmatprep.subr.mxu0 0.0
        %1479 = vmatpush1.msra.mxu0 0.0
        %1480 = vmatprep.subr.mxu0 0.0
        %1481 = vmatpush1.msra.mxu0 0.0
        %1482 = vmatprep.subr.mxu0 0.0
        %1483 = vmatpush1.msra.mxu0 0.0
        %1484 = vmatprep.subr.mxu0 0.0
        %1485 = vmatpush1.msra.mxu0 0.0
        %1486 = vmatprep.subr.mxu0 0.0
        %1487 = vmatpush1.msra.mxu0 0.0
        %1488 = vmatprep.subr.mxu0 0.0
        %1489 = vmatpush1.msra.mxu0 0.0
        %1490 = vmatprep.subr.mxu0 0.0
        %1491 = vmatpush1.msra.mxu0 0.0
        %1492 = vmatprep.subr.mxu0 0.0
        %1493 = vmatpush1.msra.mxu0 0.0
        %1494 = vmatprep.subr.mxu0 0.0
        %1495 = vmatpush1.msra.mxu0 0.0
        %1496 = vmatprep.subr.mxu0 0.0
        %1497 = vmatpush1.msra.mxu0 %v1464
        %1498 = vmatprep.subr.mxu0 0.0
        %1499 = vmatpush1.msra.mxu0 %v1463
        %1500 = vmatprep.subr.mxu0 0.0
        %1501 = vmatpush2.msra.mxu0 0.0
        %1502 = vmatprep.subr.mxu0 0.0
        %1503 = vmatpush2.msra.mxu0 0.0
        %1504 = vmatprep.subr.mxu0 0.0
        %1505 = vmatpush2.msra.mxu0 0.0
        %1506 = vmatprep.subr.mxu0 0.0
        %1507 = vmatpush2.msra.mxu0 0.0
        %1508 = vmatprep.subr.mxu0 0.0
        %1509 = vmatpush2.msra.mxu0 0.0
        %1510 = vmatprep.subr.mxu0 0.0
        %1511 = vmatpush2.msra.mxu0 0.0
        %1512 = vmatprep.subr.mxu0 0.0
        %1513 = vmatpush2.msra.mxu0 0.0
        %1514 = vmatprep.subr.mxu0 0.0
        %1515 = vmatpush2.msra.mxu0 0.0
        %1516 = vmatprep.subr.mxu0 0.0
        %1517 = vmatpush2.msra.mxu0 0.0
        %1518 = vmatprep.subr.mxu0 0.0
        %1519 = vmatpush2.msra.mxu0 0.0
        %1520 = vmatprep.subr.mxu0 0.0
        %1521 = vmatpush2.msra.mxu0 0.0
        %1522 = vmatprep.subr.mxu0 0.0
        %1523 = vmatpush2.msra.mxu0 0.0
        %1524 = vmatprep.subr.mxu0 0.0
        %1525 = vmatpush2.msra.mxu0 0.0
        %1526 = vmatprep.subr.mxu0 0.0
        %1527 = vmatpush2.msra.mxu0 0.0
        %1528 = vmatprep.subr.mxu0 0.0
        %1529 = vmatpush2.msra.mxu0 0.0
        %1530 = vmatprep.subr.mxu0 0.0
        %1531 = vmatpush2.msra.mxu0 0.0
        %1532 = vmatprep.mubr.f32.mxu0 0.0
        %1533 = vmatmul.mubr.f32.gmra.mxu0 %v1466
        %v1534 = vpop.f32.mrf.mxu0
        %v1535 = vadd.f32 0.0, %v1534
        %v1536 = vpop.f32.mrf.mxu0
        %1537 = vdwg.mxu0
        %1538 = vst.msk [vmem:[#allocation6 + $0x2] sm:$0x1] %vm1354, %v1535
        %1540 = vrot.lane.b32.xlu0 %v1535, 4
        %v1541 = vpop.permute.xlu0 %1540
        %1543 = vst.msk [vmem:[#allocation6 + $0x1] sm:$0x2] %vm1360, %v1541
        %1544 = vrot.lane.b32.xlu0 %v1535, 8
        %v1545 = vpop.permute.xlu0 %1544
        %1547 = vst.msk [vmem:[#allocation6] sm:$0x4] %vm1365, %v1545
        %1548 = vrot.lane.b32.xlu0 %v1535, 12
        %v1549 = vpop.permute.xlu0 %1548
        %1551 = vst.msk [vmem:[#allocation6 - $0x1] sm:$0x8] %vm1370, %v1549
        %v1552 = vld [vmem:[%s6] sm:$0xf]
        %v1553 = vld [vmem:[#allocation5 + $0x30] sm:$0xff]
        %v1554 = vld [vmem:[#allocation5 + $0x38] sm:$0xff]
        %v1556 = vsel %vm420, %v1552, 0
        %1558 = vmatprep.subr.mxu0 0.0
        %1559 = vmatpush1.msra.mxu0 0.0
        %1560 = vmatprep.subr.mxu0 0.0
        %1561 = vmatpush1.msra.mxu0 0.0
        %1562 = vmatprep.subr.mxu0 0.0
        %1563 = vmatpush1.msra.mxu0 0.0
        %1564 = vmatprep.subr.mxu0 0.0
        %1565 = vmatpush1.msra.mxu0 0.0
        %1566 = vmatprep.subr.mxu0 0.0
        %1567 = vmatpush1.msra.mxu0 0.0
        %1568 = vmatprep.subr.mxu0 0.0
        %1569 = vmatpush1.msra.mxu0 0.0
        %1570 = vmatprep.subr.mxu0 0.0
        %1571 = vmatpush1.msra.mxu0 0.0
        %1572 = vmatprep.subr.mxu0 0.0
        %1573 = vmatpush1.msra.mxu0 0.0
        %1574 = vmatprep.subr.mxu0 0.0
        %1575 = vmatpush1.msra.mxu0 0.0
        %1576 = vmatprep.subr.mxu0 0.0
        %1577 = vmatpush1.msra.mxu0 0.0
        %1578 = vmatprep.subr.mxu0 0.0
        %1579 = vmatpush1.msra.mxu0 0.0
        %1580 = vmatprep.subr.mxu0 0.0
        %1581 = vmatpush1.msra.mxu0 0.0
        %1582 = vmatprep.subr.mxu0 0.0
        %1583 = vmatpush1.msra.mxu0 0.0
        %1584 = vmatprep.subr.mxu0 0.0
        %1585 = vmatpush1.msra.mxu0 0.0
        %1586 = vmatprep.subr.mxu0 0.0
        %1587 = vmatpush1.msra.mxu0 %v1554
        %1588 = vmatprep.subr.mxu0 0.0
        %1589 = vmatpush1.msra.mxu0 %v1553
        %1590 = vmatprep.subr.mxu0 0.0
        %1591 = vmatpush2.msra.mxu0 0.0
        %1592 = vmatprep.subr.mxu0 0.0
        %1593 = vmatpush2.msra.mxu0 0.0
        %1594 = vmatprep.subr.mxu0 0.0
        %1595 = vmatpush2.msra.mxu0 0.0
        %1596 = vmatprep.subr.mxu0 0.0
        %1597 = vmatpush2.msra.mxu0 0.0
        %1598 = vmatprep.subr.mxu0 0.0
        %1599 = vmatpush2.msra.mxu0 0.0
        %1600 = vmatprep.subr.mxu0 0.0
        %1601 = vmatpush2.msra.mxu0 0.0
        %1602 = vmatprep.subr.mxu0 0.0
        %1603 = vmatpush2.msra.mxu0 0.0
        %1604 = vmatprep.subr.mxu0 0.0
        %1605 = vmatpush2.msra.mxu0 0.0
        %1606 = vmatprep.subr.mxu0 0.0
        %1607 = vmatpush2.msra.mxu0 0.0
        %1608 = vmatprep.subr.mxu0 0.0
        %1609 = vmatpush2.msra.mxu0 0.0
        %1610 = vmatprep.subr.mxu0 0.0
        %1611 = vmatpush2.msra.mxu0 0.0
        %1612 = vmatprep.subr.mxu0 0.0
        %1613 = vmatpush2.msra.mxu0 0.0
        %1614 = vmatprep.subr.mxu0 0.0
        %1615 = vmatpush2.msra.mxu0 0.0
        %1616 = vmatprep.subr.mxu0 0.0
        %1617 = vmatpush2.msra.mxu0 0.0
        %1618 = vmatprep.subr.mxu0 0.0
        %1619 = vmatpush2.msra.mxu0 0.0
        %1620 = vmatprep.subr.mxu0 0.0
        %1621 = vmatpush2.msra.mxu0 0.0
        %1622 = vmatprep.mubr.f32.mxu0 0.0
        %1623 = vmatmul.mubr.f32.gmra.mxu0 %v1556
        %v1624 = vpop.f32.mrf.mxu0
        %v1625 = vadd.f32 0.0, %v1624
        %v1626 = vpop.f32.mrf.mxu0
        %1627 = vdwg.mxu0
        %1628 = vst.msk [vmem:[#allocation6 + $0x3] sm:$0x1] %vm1354, %v1625
        %1630 = vrot.lane.b32.xlu0 %v1625, 4
        %v1631 = vpop.permute.xlu0 %1630
        %1633 = vst.msk [vmem:[#allocation6 + $0x2] sm:$0x2] %vm1360, %v1631
        %1634 = vrot.lane.b32.xlu0 %v1625, 8
        %v1635 = vpop.permute.xlu0 %1634
        %1637 = vst.msk [vmem:[#allocation6 + $0x1] sm:$0x4] %vm1365, %v1635
        %1638 = vrot.lane.b32.xlu0 %v1625, 12
        %v1639 = vpop.permute.xlu0 %1638
        %1641 = vst.msk [vmem:[#allocation6] sm:$0x8] %vm1370, %v1639
        %v1642 = vld [vmem:[#allocation6] sm:$0xf]
        %v1643 = vld [vmem:[%s401] sm:$0xff]
        %v1644 = vld [vmem:[%s401 + $0x8] sm:$0xff]
        %v1646 = vsel %vm420, %v1642, 0
        %1648 = vmatprep.subr.mxu0 0.0
        %1649 = vmatpush1.msra.mxu0 0.0
        %1650 = vmatprep.subr.mxu0 0.0
        %1651 = vmatpush1.msra.mxu0 0.0
        %1652 = vmatprep.subr.mxu0 0.0
        %1653 = vmatpush1.msra.mxu0 0.0
        %1654 = vmatprep.subr.mxu0 0.0
        %1655 = vmatpush1.msra.mxu0 0.0
        %1656 = vmatprep.subr.mxu0 0.0
        %1657 = vmatpush1.msra.mxu0 0.0
        %1658 = vmatprep.subr.mxu0 0.0
        %1659 = vmatpush1.msra.mxu0 0.0
        %1660 = vmatprep.subr.mxu0 0.0
        %1661 = vmatpush1.msra.mxu0 0.0
        %1662 = vmatprep.subr.mxu0 0.0
        %1663 = vmatpush1.msra.mxu0 0.0
        %1664 = vmatprep.subr.mxu0 0.0
        %1665 = vmatpush1.msra.mxu0 0.0
        %1666 = vmatprep.subr.mxu0 0.0
        %1667 = vmatpush1.msra.mxu0 0.0
        %1668 = vmatprep.subr.mxu0 0.0
        %1669 = vmatpush1.msra.mxu0 0.0
        %1670 = vmatprep.subr.mxu0 0.0
        %1671 = vmatpush1.msra.mxu0 0.0
        %1672 = vmatprep.subr.mxu0 0.0
        %1673 = vmatpush1.msra.mxu0 0.0
        %1674 = vmatprep.subr.mxu0 0.0
        %1675 = vmatpush1.msra.mxu0 0.0
        %1676 = vmatprep.subr.mxu0 0.0
        %1677 = vmatpush1.msra.mxu0 %v1644
        %1678 = vmatprep.subr.mxu0 0.0
        %1679 = vmatpush1.msra.mxu0 %v1643
        %1680 = vmatprep.subr.mxu0 0.0
        %1681 = vmatpush2.msra.mxu0 0.0
        %1682 = vmatprep.subr.mxu0 0.0
        %1683 = vmatpush2.msra.mxu0 0.0
        %1684 = vmatprep.subr.mxu0 0.0
        %1685 = vmatpush2.msra.mxu0 0.0
        %1686 = vmatprep.subr.mxu0 0.0
        %1687 = vmatpush2.msra.mxu0 0.0
        %1688 = vmatprep.subr.mxu0 0.0
        %1689 = vmatpush2.msra.mxu0 0.0
        %1690 = vmatprep.subr.mxu0 0.0
        %1691 = vmatpush2.msra.mxu0 0.0
        %1692 = vmatprep.subr.mxu0 0.0
        %1693 = vmatpush2.msra.mxu0 0.0
        %1694 = vmatprep.subr.mxu0 0.0
        %1695 = vmatpush2.msra.mxu0 0.0
        %1696 = vmatprep.subr.mxu0 0.0
        %1697 = vmatpush2.msra.mxu0 0.0
        %1698 = vmatprep.subr.mxu0 0.0
        %1699 = vmatpush2.msra.mxu0 0.0
        %1700 = vmatprep.subr.mxu0 0.0
        %1701 = vmatpush2.msra.mxu0 0.0
        %1702 = vmatprep.subr.mxu0 0.0
        %1703 = vmatpush2.msra.mxu0 0.0
        %1704 = vmatprep.subr.mxu0 0.0
        %1705 = vmatpush2.msra.mxu0 0.0
        %1706 = vmatprep.subr.mxu0 0.0
        %1707 = vmatpush2.msra.mxu0 0.0
        %1708 = vmatprep.subr.mxu0 0.0
        %1709 = vmatpush2.msra.mxu0 0.0
        %1710 = vmatprep.subr.mxu0 0.0
        %1711 = vmatpush2.msra.mxu0 0.0
        %1712 = vmatprep.mubr.f32.mxu0 0.0
        %1713 = vmatmul.mubr.f32.gmra.mxu0 %v1646
        %v1714 = vpop.f32.mrf.mxu0
        %v1715 = vadd.f32 0.0, %v1714
        %v1716 = vpop.f32.mrf.mxu0
        %1717 = vdwg.mxu0
        %vm1718 = vcmask 125952
        %v1719 = vsel %vm1718, %v1642, 0.0
        %1720 = vadd.xlane.f32.xlu0 %v1719
        %v1721 = vpop.xlane.xlu0 %1720
        %v1722 = vrcp.pop %v1721
        %v1723 = vmul.f32 %v1715, %v1722
        %vm1724 = vcmask 60416
        %1725 = vst.msk [vmem:[%s381] sm:$0xf] %vm1724, %v1723
        %s1726 = sand.u32 %s223, 1
        %s1727 = scalar_lea.sflag [#allocation8], %s1726
        %s1728 = sand.u32 %s223, 1
        %s1729 = smul.addr %s1728, 4
        %s1730 = scalar_lea.vmem [#allocation7], %s1729
        %s1731 = sand.u32 %s249, 1
        %s1732 = scalar_lea.sflag [#allocation10], %s1731
        %s1733 = sand.u32 %s249, 1
        %s1734 = smul.addr %s1733, 4
        %s1735 = scalar_lea.vmem [#allocation9], %s1734
        // Predicated region
        $region53: #{tpu_custom_call.1} parent=51 // pred_check
          %p1736 = pneg %p233
        $region54: #{tpu_custom_call.1} parent=51 // pred_check_branch
          %1738 = sbr.rel (%p1736) target = $region56
        $region55: #{tpu_custom_call.1} parent=51 // pred_region
          %s1740 = ssub.s32 64, 64
          %1741 = vsyncadd %s1727, %s1740
          %s1742 = smul.addr %s27, 64
          %s1743 = scalar_lea.hbm %s8, %s1742
          %s1745 = sshll.u32 %s1730, 4
          %s1746 = int_to_ptr.vmem [resolvable:$true] %s1745
          %1748 = dma.vmem_to_hbm [thread:$0]  %s1746, 64, %s1743, %s1727
        $region56: #{tpu_custom_call.1} parent=51 // pred_fallthru
          _
        // Predicated region
        $region57: #{tpu_custom_call.1} parent=51 // pred_check
          %p1749 = pneg %p259
        $region58: #{tpu_custom_call.1} parent=51 // pred_check_branch
          %1751 = sbr.rel (%p1749) target = $region60
        $region59: #{tpu_custom_call.1} parent=51 // pred_region
          %s1753 = ssub.s32 64, 64
          %1754 = vsyncadd %s1732, %s1753
          %s1755 = smul.addr %s27, 64
          %s1756 = scalar_lea.hbm %s9, %s1755
          %s1758 = sshll.u32 %s1735, 4
          %s1759 = int_to_ptr.vmem [resolvable:$true] %s1758
          %1761 = dma.vmem_to_hbm [thread:$0]  %s1759, 64, %s1756, %s1732
        $region60: #{tpu_custom_call.1} parent=51 // pred_fallthru
          _
      $region52: #{tpu_custom_call.1} parent=5 // pred_fallthru
        _
      %p1762 = scmp.le.s32.totalorder 2, %s22
      // Predicated region
      $region61: #{tpu_custom_call.1} parent=5 // pred_check
        %p1763 = pneg %p1762
      $region62: #{tpu_custom_call.1} parent=5 // pred_check_branch
        %1765 = sbr.rel (%p1763) target = $region64
      $region63: #{tpu_custom_call.1} parent=5 // pred_region
        %s1766 = ssub.s32 %s22, 2
        // Predicated region
        $region65: #{tpu_custom_call.1} parent=63 // pred_check
          %p1767 = pneg %p239
        $region66: #{tpu_custom_call.1} parent=63 // pred_check_branch
          %1769 = sbr.rel (%p1767) target = $region68
        $region67: #{tpu_custom_call.1} parent=63 // pred_region
          %s1770 = sand.u32 %s224, 1
          %s1771 = scalar_lea.sflag [#allocation8], %s1770
          %s1772 = sand.u32 %s224, 1
          %s1773 = smul.addr %s1772, 4
          %s1774 = scalar_lea.vmem [#allocation7], %s1773
          %1775 = dma.done %s1771, 64
        $region68: #{tpu_custom_call.1} parent=63 // pred_fallthru
          _
        // Predicated region
        $region69: #{tpu_custom_call.1} parent=63 // pred_check
          %p1776 = pneg %p265
        $region70: #{tpu_custom_call.1} parent=63 // pred_check_branch
          %1778 = sbr.rel (%p1776) target = $region72
        $region71: #{tpu_custom_call.1} parent=63 // pred_region
          %s1779 = sand.u32 %s250, 1
          %s1780 = scalar_lea.sflag [#allocation10], %s1779
          %s1781 = sand.u32 %s250, 1
          %s1782 = smul.addr %s1781, 4
          %s1783 = scalar_lea.vmem [#allocation9], %s1782
          %1784 = dma.done %s1780, 64
        $region72: #{tpu_custom_call.1} parent=63 // pred_fallthru
          _
      $region64: #{tpu_custom_call.1} parent=5 // pred_fallthru
        _
    $region6: #{tpu_custom_call.1} parent=1 // loop_footer
      %s26 = sadd.s32 1, %s22
    $region7: #{tpu_custom_call.1} parent=1 // loop_footer_branch
      %21 = sbr.rel target = $region3
    $region8: #{tpu_custom_call.1} parent=1 // loop_exit
      _
    %1785 = vsyncpa [#allocation8], 1
    %s1786 = scalar_lea.sflag [#allocation8], 1
    %1787 = vsyncpa %s1786, 1
    %1788 = vsyncpa [#allocation10], 1
    %s1789 = scalar_lea.sflag [#allocation10], 1
    %1790 = vsyncpa %s1789, 1

</llo_original>
